<compile_context>
chip_gen: v6e
topology: v6e:2x2x1
jax: 0.10.0
libtpu: 0.0.40
codegen_flags: <defaults>
</compile_context>

<pallas_src>
import jax
import jax.numpy as jnp
from jax.experimental import pallas as pl
from jax.experimental.pallas import tpu as pltpu

_LANE = 128     # TPU lane width
_SUBLANE = 8    # TPU sublane count (f32)


def _discriminator_kernel(x_ref, w1_ref, b1_ref, w2_ref, b2_ref, w3_ref, b3_ref,
                          o_ref):
    # x_ref : (C_in, TM)      f32 pixel tile (channels on sublanes, pixels on lanes)
    # w?_ref: (C_out, C_in)   bf16 layer weights (1x1-conv kernels, out = W @ X)
    # b?_ref: (C_out, 1)      f32 bias (broadcast over pixels/lanes)
    # o_ref : (C_out_pad, TM) f32 output slab (channels padded to 8 sublanes)
    x = x_ref[...].astype(jnp.bfloat16)                 # in-kernel cast (no HBM pass)

    h1 = jnp.dot(w1_ref[...], x, preferred_element_type=jnp.float32)
    h1 = jnp.maximum(h1 + b1_ref[...], 0.0)             # Dropout2d(eval)=id, ReLU

    h2 = jnp.dot(w2_ref[...], h1.astype(jnp.bfloat16),
                 preferred_element_type=jnp.float32)
    h2 = jnp.maximum(h2 + b2_ref[...], 0.0)             # Dropout2d(eval)=id, ReLU

    h3 = jnp.dot(w3_ref[...], h2.astype(jnp.bfloat16),
                 preferred_element_type=jnp.float32)
    o_ref[...] = (h3 + b3_ref[...]).astype(o_ref.dtype)


def _vmem_cap_bytes():
    """Physical VMEM of the current chip; fall back to the smallest (v7x, 64 MiB)."""
    try:
        info = pltpu.get_tpu_info()
        for attr in ("vmem_capacity_bytes", "vmem_capacity", "vmem_size_bytes"):
            v = getattr(info, attr, None)
            if v:
                return int(v)
    except Exception:
        pass
    return 64 * 1024 * 1024


def _vmem_estimate(c_in, dim1, dim2, c_out_pad, tm):
    """Rough upper bound on VMEM working set for one grid step (bytes)."""
    inp = 2 * c_in * tm * 4                                        # x tile, 2 bufs, f32
    x_bf = c_in * tm * 2                                           # in-kernel bf16 copy
    wts = 2 * 2 * (dim1 * c_in + dim2 * dim1 + c_out_pad * dim2)   # bf16 weights, 2 bufs
    bia = 2 * 4 * (dim1 + dim2 + c_out_pad)
    inter = tm * (dim1 * 6 + dim2 * 6 + c_out_pad * 4)             # f32 + bf16 intermediates
    out = 2 * c_out_pad * tm * 4                                   # out tile, 2 bufs
    return inp + x_bf + wts + bia + inter + out


def discriminator_forward(x_nchw, params, *, tm=1024):
    """Fused forward pass of the Discriminator.

    x_nchw : (N, C_in, H, W) float32
    params : dict produced by init_params (bf16 (C_out, C_in) weights, f32
             (C_out, 1) biases, sublane-padded last layer) + "c_out".
    returns: (N, C_out, H, W) float32
    """
    n, c_in, hh, ww = x_nchw.shape
    hw = hh * ww
    c_out = params["c_out"]
    dim1 = params["w1"].shape[0]
    dim2 = params["w2"].shape[0]
    c_out_pad = params["w3"].shape[0]

    # Generation-aware VMEM budget (v7x: 64 MiB, v5e/v6e: 128 MiB physical).
    vmem_cap = _vmem_cap_bytes()
    vmem_limit = int(vmem_cap * 0.85)

    # Pixel tile: multiple of 128 lanes, capped at round-up(hw), fits VMEM.
    tm_eff = max(_LANE, min((tm // _LANE) * _LANE, pl.cdiv(hw, _LANE) * _LANE))
    while tm_eff > _LANE and _vmem_estimate(c_in, dim1, dim2, c_out_pad,
                                            tm_eff) > vmem_limit:
        tm_eff -= _LANE

    # Prefer a tile that divides hw exactly (no partial tile, no pad copy).
    if hw % tm_eff != 0:
        for cand in range(tm_eff, _LANE - 1, -_LANE):
            if hw % cand == 0:
                tm_eff = cand
                break

    hw_pad = pl.cdiv(hw, tm_eff) * tm_eff

    # NCHW -> (N, C_in, H*W): channels stay major, pixels on the lane axis.
    x3d = x_nchw.reshape(n, c_in, hw)
    if hw_pad != hw:
        x3d = jnp.pad(x3d, ((0, 0), (0, 0), (0, hw_pad - hw)))

    grid = (n, hw_pad // tm_eff)

    out3d = pl.pallas_call(
        _discriminator_kernel,
        out_shape=jax.ShapeDtypeStruct((n, c_out_pad, hw_pad), jnp.float32),
        grid=grid,
        in_specs=[
            # pixel tile: streamed / double-buffered over the grid
            pl.BlockSpec((None, c_in, tm_eff), lambda b, i: (b, 0, i)),
            # weights / biases: constant block index -> stay VMEM-resident
            pl.BlockSpec((dim1, c_in), lambda b, i: (0, 0)),
            pl.BlockSpec((dim1, 1), lambda b, i: (0, 0)),
            pl.BlockSpec((dim2, dim1), lambda b, i: (0, 0)),
            pl.BlockSpec((dim2, 1), lambda b, i: (0, 0)),
            pl.BlockSpec((c_out_pad, dim2), lambda b, i: (0, 0)),
            pl.BlockSpec((c_out_pad, 1), lambda b, i: (0, 0)),
        ],
        out_specs=pl.BlockSpec((None, c_out_pad, tm_eff), lambda b, i: (b, 0, i)),
        compiler_params=pltpu.CompilerParams(
            dimension_semantics=("parallel", "parallel"),  # megacore sharding
            vmem_limit_bytes=vmem_limit,
        ),
    )(x3d, params["w1"], params["b1"], params["w2"], params["b2"],
      params["w3"], params["b3"])

    # Drop channel padding + pixel padding; reshapes are free (contiguous dims).
    out3d = out3d[:, :c_out, :hw]
    return out3d.reshape(n, c_out, hh, ww)


def init_params(key, input_dim, output_dim):
    """Deterministic synthetic parameters matching the module's shapes.

    PyTorch Conv2d(C_in, C_out, 1) weight is (C_out, C_in, 1, 1); stored here
    as the equivalent channel-major matmul weight (C_out, C_in) so the kernel
    computes out = W @ X directly on NCHW data.  Weights are bf16 (MXU-native),
    biases f32 with shape (C_out, 1).  The last layer is zero-padded to a
    multiple of 8 output channels so the kernel's store path is full-sublane.
    """
    dim1 = 1024 if input_dim == 4096 else 512
    dim2 = dim1 // 2
    c_out_pad = max(_SUBLANE,
                    ((output_dim + _SUBLANE - 1) // _SUBLANE) * _SUBLANE)

    k = jax.random.split(key, 6)
    s1 = 1.0 / (input_dim ** 0.5)
    s2 = 1.0 / (dim1 ** 0.5)
    s3 = 1.0 / (dim2 ** 0.5)

    w1 = jax.random.uniform(k[0], (dim1, input_dim), jnp.float32, -s1, s1)
    b1 = jax.random.uniform(k[1], (dim1, 1), jnp.float32, -s1, s1)
    w2 = jax.random.uniform(k[2], (dim2, dim1), jnp.float32, -s2, s2)
    b2 = jax.random.uniform(k[3], (dim2, 1), jnp.float32, -s2, s2)
    w3 = jax.random.uniform(k[4], (output_dim, dim2), jnp.float32, -s3, s3)
    b3 = jax.random.uniform(k[5], (output_dim, 1), jnp.float32, -s3, s3)

    w3p = jnp.zeros((c_out_pad, dim2), jnp.float32).at[:output_dim].set(w3)
    b3p = jnp.zeros((c_out_pad, 1), jnp.float32).at[:output_dim].set(b3)

    return {
        "w1": w1.astype(jnp.bfloat16), "b1": b1,
        "w2": w2.astype(jnp.bfloat16), "b2": b2,
        "w3": w3p.astype(jnp.bfloat16), "b3": b3p,
        "c_out": output_dim,
    }


def _reference_forward(x_nchw, params):
    """Plain-JAX reference with the same bf16-in / f32-accumulate math."""
    n, c_in, hh, ww = x_nchw.shape
    c_out = params["c_out"]
    x = x_nchw.reshape(n, c_in, hh * ww).astype(jnp.bfloat16)

    def layer(w, b, h, relu):
        y = jnp.einsum("ok,nkm->nom", w, h,
                       preferred_element_type=jnp.float32) + b
        return jnp.maximum(y, 0.0) if relu else y

    h1 = layer(params["w1"], params["b1"], x, True)
    h2 = layer(params["w2"], params["b2"], h1.astype(jnp.bfloat16), True)
    h3 = layer(params["w3"], params["b3"], h2.astype(jnp.bfloat16), False)
    return h3[:, :c_out, :].reshape(n, c_out, hh, ww)


if __name__ == "__main__":
    key = jax.random.PRNGKey(0)
    kx, kp = jax.random.split(key)

    # Small shapes consistent with the module: input_dim != 4096 -> dim1 = 512.
    input_dim, output_dim = 128, 2
    batch, spatial = 2, 16          # x: (2, 128, 16, 16) NCHW, 256 pixels/image

    x = jax.random.normal(kx, (batch, input_dim, spatial, spatial),
                          dtype=jnp.float32)
    params = init_params(kp, input_dim, output_dim)

    out = jax.block_until_ready(discriminator_forward(x, params))
    ref = jax.block_until_ready(_reference_forward(x, params))

    assert out.shape == (batch, output_dim, spatial, spatial), out.shape
    assert jnp.allclose(out, ref, atol=1e-2, rtol=1e-2), "mismatch vs reference"

    print("KERNEL_OK")
</pallas_src>

<mosaic_0001>
module attributes {stable_mosaic.version = 11 : i64} {
  func.func @_discriminator_kernel(%arg0: i32, %arg1: i32, %arg2: memref<1x128x256xf32, #tpu.memory_space<vmem>>, %arg3: memref<512x128xbf16, #tpu.memory_space<vmem>>, %arg4: memref<512x1xf32, #tpu.memory_space<vmem>>, %arg5: memref<256x512xbf16, #tpu.memory_space<vmem>>, %arg6: memref<256x1xf32, #tpu.memory_space<vmem>>, %arg7: memref<8x256xbf16, #tpu.memory_space<vmem>>, %arg8: memref<8x1xf32, #tpu.memory_space<vmem>>, %arg9: memref<1x8x256xf32, #tpu.memory_space<vmem>>) attributes {dimension_semantics = [#tpu.dimension_semantics<parallel>, #tpu.dimension_semantics<parallel>], iteration_bounds = array<i64: 2, 1>, scalar_prefetch = 0 : i64, scratch_operands = 0 : i64, tpu.core_type = #tpu.core_type<tc>, window_params = [{transform_indices = @transform_0, window_bounds = array<i64: 1, 128, 256>}, {pipeline_mode = #tpu.pipeline_mode<synchronous>, transform_indices = @transform_1, window_bounds = array<i64: 512, 128>}, {pipeline_mode = #tpu.pipeline_mode<synchronous>, transform_indices = @transform_2, window_bounds = array<i64: 512, 1>}, {pipeline_mode = #tpu.pipeline_mode<synchronous>, transform_indices = @transform_3, window_bounds = array<i64: 256, 512>}, {pipeline_mode = #tpu.pipeline_mode<synchronous>, transform_indices = @transform_4, window_bounds = array<i64: 256, 1>}, {pipeline_mode = #tpu.pipeline_mode<synchronous>, transform_indices = @transform_5, window_bounds = array<i64: 8, 256>}, {pipeline_mode = #tpu.pipeline_mode<synchronous>, transform_indices = @transform_6, window_bounds = array<i64: 8, 1>}, {transform_indices = @transform_7, window_bounds = array<i64: 1, 8, 256>}]} {
    %c0 = arith.constant 0 : index
    %c0_0 = arith.constant 0 : index
    %c0_1 = arith.constant 0 : index
    %0 = vector.load %arg2[%c0, %c0_0, %c0_1] : memref<1x128x256xf32, #tpu.memory_space<vmem>>, vector<1x128x256xf32>
    %1 = vector.shape_cast %0 : vector<1x128x256xf32> to vector<128x256xf32>
    %2 = arith.truncf %1 : vector<128x256xf32> to vector<128x256xbf16>
    %c0_2 = arith.constant 0 : index
    %c0_3 = arith.constant 0 : index
    %3 = vector.load %arg3[%c0_2, %c0_3] : memref<512x128xbf16, #tpu.memory_space<vmem>>, vector<512x128xbf16>
    %cst = arith.constant dense<0.000000e+00> : vector<512x256xf32>
    %4 = tpu.matmul %3, %2, %cst {dimension_numbers = #tpu.dot_dimension_numbers<[1], [0], [0], [1], [0, 0, 1, 1], [], []>} : vector<512x128xbf16>, vector<128x256xbf16>, vector<512x256xf32> -> vector<512x256xf32>
    %c0_4 = arith.constant 0 : index
    %c0_5 = arith.constant 0 : index
    %5 = vector.load %arg4[%c0_4, %c0_5] : memref<512x1xf32, #tpu.memory_space<vmem>>, vector<512x1xf32>
    %6 = vector.broadcast %5 : vector<512x1xf32> to vector<512x256xf32>
    %7 = arith.addf %4, %6 : vector<512x256xf32>
    %cst_6 = arith.constant 0.000000e+00 : f32
    %8 = vector.broadcast %cst_6 : f32 to vector<512x256xf32>
    %9 = arith.maximumf %7, %8 : vector<512x256xf32>
    %c0_7 = arith.constant 0 : index
    %c0_8 = arith.constant 0 : index
    %10 = vector.load %arg5[%c0_7, %c0_8] : memref<256x512xbf16, #tpu.memory_space<vmem>>, vector<256x512xbf16>
    %11 = arith.truncf %9 : vector<512x256xf32> to vector<512x256xbf16>
    %cst_9 = arith.constant dense<0.000000e+00> : vector<256x256xf32>
    %12 = tpu.matmul %10, %11, %cst_9 {dimension_numbers = #tpu.dot_dimension_numbers<[1], [0], [0], [1], [0, 0, 1, 1], [], []>} : vector<256x512xbf16>, vector<512x256xbf16>, vector<256x256xf32> -> vector<256x256xf32>
    %c0_10 = arith.constant 0 : index
    %c0_11 = arith.constant 0 : index
    %13 = vector.load %arg6[%c0_10, %c0_11] : memref<256x1xf32, #tpu.memory_space<vmem>>, vector<256x1xf32>
    %14 = vector.broadcast %13 : vector<256x1xf32> to vector<256x256xf32>
    %15 = arith.addf %12, %14 : vector<256x256xf32>
    %cst_12 = arith.constant 0.000000e+00 : f32
    %16 = vector.broadcast %cst_12 : f32 to vector<256x256xf32>
    %17 = arith.maximumf %15, %16 : vector<256x256xf32>
    %c0_13 = arith.constant 0 : index
    %c0_14 = arith.constant 0 : index
    %18 = vector.load %arg7[%c0_13, %c0_14] : memref<8x256xbf16, #tpu.memory_space<vmem>>, vector<8x256xbf16>
    %19 = arith.truncf %17 : vector<256x256xf32> to vector<256x256xbf16>
    %cst_15 = arith.constant dense<0.000000e+00> : vector<8x256xf32>
    %20 = tpu.matmul %18, %19, %cst_15 {dimension_numbers = #tpu.dot_dimension_numbers<[1], [0], [0], [1], [0, 0, 1, 1], [], []>} : vector<8x256xbf16>, vector<256x256xbf16>, vector<8x256xf32> -> vector<8x256xf32>
    %c0_16 = arith.constant 0 : index
    %c0_17 = arith.constant 0 : index
    %21 = vector.load %arg8[%c0_16, %c0_17] : memref<8x1xf32, #tpu.memory_space<vmem>>, vector<8x1xf32>
    %22 = vector.broadcast %21 : vector<8x1xf32> to vector<8x256xf32>
    %23 = arith.addf %20, %22 : vector<8x256xf32>
    %c0_18 = arith.constant 0 : index
    %c0_19 = arith.constant 0 : index
    %c0_20 = arith.constant 0 : index
    %24 = vector.load %arg9[%c0_18, %c0_19, %c0_20] : memref<1x8x256xf32, #tpu.memory_space<vmem>>, vector<1x8x256xf32>
    %25 = vector.shape_cast %24 : vector<1x8x256xf32> to vector<8x256xf32>
    %26 = vector.shape_cast %23 : vector<8x256xf32> to vector<1x8x256xf32>
    tpu.vector_store %arg9[%c0_18, %c0_19, %c0_20], %26 {strides = array<i32>} : memref<1x8x256xf32, #tpu.memory_space<vmem>>, vector<1x8x256xf32>,
    return
  }
  func.func @transform_0(%arg0: i32, %arg1: i32) -> (i32, i32, i32) {
    %c0_i32 = arith.constant 0 : i32
    %c0_i32_0 = arith.constant 0 : i32
    return %arg0, %c0_i32, %arg1 : i32, i32, i32
  }
  func.func @transform_1(%arg0: i32, %arg1: i32) -> (i32, i32) {
    %c0_i32 = arith.constant 0 : i32
    %c0_i32_0 = arith.constant 0 : i32
    %c0_i32_1 = arith.constant 0 : i32
    return %c0_i32, %c0_i32_0 : i32, i32
  }
  func.func @transform_2(%arg0: i32, %arg1: i32) -> (i32, i32) {
    %c0_i32 = arith.constant 0 : i32
    %c0_i32_0 = arith.constant 0 : i32
    %c0_i32_1 = arith.constant 0 : i32
    return %c0_i32, %c0_i32_0 : i32, i32
  }
  func.func @transform_3(%arg0: i32, %arg1: i32) -> (i32, i32) {
    %c0_i32 = arith.constant 0 : i32
    %c0_i32_0 = arith.constant 0 : i32
    %c0_i32_1 = arith.constant 0 : i32
    return %c0_i32, %c0_i32_0 : i32, i32
  }
  func.func @transform_4(%arg0: i32, %arg1: i32) -> (i32, i32) {
    %c0_i32 = arith.constant 0 : i32
    %c0_i32_0 = arith.constant 0 : i32
    %c0_i32_1 = arith.constant 0 : i32
    return %c0_i32, %c0_i32_0 : i32, i32
  }
  func.func @transform_5(%arg0: i32, %arg1: i32) -> (i32, i32) {
    %c0_i32 = arith.constant 0 : i32
    %c0_i32_0 = arith.constant 0 : i32
    %c0_i32_1 = arith.constant 0 : i32
    return %c0_i32, %c0_i32_0 : i32, i32
  }
  func.func @transform_6(%arg0: i32, %arg1: i32) -> (i32, i32) {
    %c0_i32 = arith.constant 0 : i32
    %c0_i32_0 = arith.constant 0 : i32
    %c0_i32_1 = arith.constant 0 : i32
    return %c0_i32, %c0_i32_0 : i32, i32
  }
  func.func @transform_7(%arg0: i32, %arg1: i32) -> (i32, i32, i32) {
    %c0_i32 = arith.constant 0 : i32
    %c0_i32_0 = arith.constant 0 : i32
    return %arg0, %c0_i32, %arg1 : i32, i32, i32
  }
}

</mosaic_0001>

<llo_original>
// kernel: tpu_custom_call.1
$region0: #{tpu_custom_call.1}
  #allocation0 [shape = 'u32[]', space=smem, size = 0x4, offset = 0x4, fixed_abs, tag = 'smem constant byte address 0x4 - core index']
  #allocation1 [shape = 'u32[144,128]{1,0:T(1,128)}', space=vmem, size = 0x12000, scoped, tag = 'internal scratch']
  %s0 = inlined_call_operand.vmem [shape: f32[2,128,256], index: 0, kind: input, shape index: {}]
  %s1 = inlined_call_operand.vmem [shape: bf16[512,128], index: 1, kind: input, shape index: {}]
  %s2 = inlined_call_operand.vmem [shape: f32[512,1], index: 2, kind: input, shape index: {}]
  %s3 = inlined_call_operand.hbm [shape: bf16[256,512], index: 3, kind: input, shape index: {}]
  %s4 = inlined_call_operand.vmem [shape: f32[256,1], index: 4, kind: input, shape index: {}]
  %s5 = inlined_call_operand.vmem [shape: bf16[8,256], index: 5, kind: input, shape index: {}]
  %s6 = inlined_call_operand.vmem [shape: f32[8,1], index: 6, kind: input, shape index: {}]
  %s7 = inlined_call_operand.hbm [shape: f32[2,8,256], index: 7, kind: output, shape index: {}]
  %s8 = sld [smem:[#allocation0]]
  $region65: #{tpu_custom_call.1} parent=0
    _
  %s10 = ssub.s32 1, %s8
  %s11 = scalar_select 0, %s10, %s8
  $region1: #{tpu_custom_call.1} parent=0
    #allocation2 [shape = 'u8[262144]{0}', space=vmem, size = 0x40000, scoped, tag = 'input window, operand 3, single buffered']
    #allocation3 [shape = 's32[2]{0}', space=sflag, size = 0x8, scoped, tag = 'scoped memory for tpu_custom_call.1']
    #allocation4 [shape = 's32[2]{0}', space=sflag, size = 0x8, scoped, tag = 'scoped memory for tpu_custom_call.1']
    #allocation5 [shape = 'u8[16384]{0}', space=vmem, size = 0x4000, scoped, tag = 'output window, operand 0']
    %12 = vsyncpa [#allocation3], 0
    %13 = vsyncpa [#allocation4], 0
    %s14 = scalar_lea.sflag [#allocation4], 1
    %15 = vsyncpa %s14, 0
    loop: start=0, step=1, limit=4
    $region2: #{tpu_custom_call.1} parent=1 // loop_pre_header
      _
    $region3: #{tpu_custom_call.1} parent=1 // loop_header
      %s17 = sphi 0, %s21
      %p18 = scmp.ge.s32.totalorder %s17, 4
      %s24 = sphi 0, %s36
      %s25 = sphi 0, %s32
      %s26 = sphi 0, %s24
      %s27 = sphi 0, %s25
      %s28 = sphi 0, %s26
      %s29 = sphi 0, %s27
      %s41 = sphi 0, %s43
      %s44 = sphi 0, %s41
      %s45 = sphi 0, %s44
      %s61 = sphi 0, %s45
      %s65 = sphi 0, %s65
      %s67 = sphi 0, %s65
      %s68 = sphi 0, %s67
      %s82 = sphi 0, %s68
      %s86 = sphi 0, %s86
      %s88 = sphi 0, %s86
      %s89 = sphi 0, %s88
      %s103 = sphi 0, %s89
      %s107 = sphi 0, %s107
      %s109 = sphi 0, %s107
      %s110 = sphi 0, %s109
      %s124 = sphi 0, %s110
      %s128 = sphi 0, %s128
      %s130 = sphi 0, %s128
      %s131 = sphi 0, %s130
      %s145 = sphi 0, %s131
      %s149 = sphi 0, %s149
      %s151 = sphi 0, %s149
      %s152 = sphi 0, %s151
      %s166 = sphi 0, %s152
      %s170 = sphi 0, %s170
      %s172 = sphi 0, %s170
      %s173 = sphi 0, %s172
      %s187 = sphi 0, %s173
      %s195 = sphi 0, %s197
      %s198 = sphi 0, %s195
      %s199 = sphi 0, %s198
      %s215 = sphi 0, %s199
    $region4: #{tpu_custom_call.1} parent=1 // loop_header_branch
      %20 = sbr.rel (%p18) target = $region8
    $region5: #{tpu_custom_call.1} parent=1 // loop_body
      %s22 = ssub.s32 %s17, 1
      %s23 = ssub.s32 %s17, 2
      %s30 = sadd.s32 1, %s25
      %p31 = scmp.ge.s32.totalorder %s30, 1
      %s32 = scalar_select %p31, 0, %s30
      %s33 = sadd.s32 1, %s24
      %s34 = scalar_select %p31, %s33, %s24
      %p35 = scmp.ge.s32.totalorder %s34, 2
      %s36 = scalar_select %p35, 0, %s34
      %s37 = ssub.s32 %s24, %s36
      %s38 = ssub.s32 %s25, %s32
      %s39 = sor.u32 %s37, %s38
      %p40 = scmp.eq.s32.totalorder %s39, 0
      %s42 = sadd.s32 %s41, 1
      %s43 = scalar_select %p40, %s41, %s42
      %p46 = pneg %p40
      %p47 = scmp.eq.s32.totalorder %s17, 1
      %p48 = por %p46, %p47
      %p49 = scmp.ne.s32.totalorder %s41, %s44
      %p50 = scmp.eq.s32.totalorder %s17, 0
      %p51 = por %p49, %p50
      %p52 = scmp.ne.s32.totalorder %s41, %s44
      %p53 = scmp.eq.s32.totalorder %s22, 1
      %p54 = por %p52, %p53
      %p55 = scmp.ne.s32.totalorder %s44, %s45
      %p56 = scmp.eq.s32.totalorder %s22, 0
      %p57 = por %p55, %p56
      %p58 = scmp.ne.s32.totalorder %s44, %s45
      %p59 = scmp.eq.s32.totalorder %s23, 1
      %p60 = por %p58, %p59
      %p62 = scmp.ne.s32.totalorder %s45, %s61
      %p63 = scmp.eq.s32.totalorder %s23, 0
      %p64 = por %p62, %p63
      %s66 = sadd.s32 %s65, 1
      %p69 = scmp.eq.s32.totalorder %s17, 1
      %p70 = scmp.ne.s32.totalorder %s65, %s67
      %p71 = scmp.eq.s32.totalorder %s17, 0
      %p72 = por %p70, %p71
      %p73 = scmp.ne.s32.totalorder %s65, %s67
      %p74 = scmp.eq.s32.totalorder %s22, 1
      %p75 = por %p73, %p74
      %p76 = scmp.ne.s32.totalorder %s67, %s68
      %p77 = scmp.eq.s32.totalorder %s22, 0
      %p78 = por %p76, %p77
      %p79 = scmp.ne.s32.totalorder %s67, %s68
      %p80 = scmp.eq.s32.totalorder %s23, 1
      %p81 = por %p79, %p80
      %p83 = scmp.ne.s32.totalorder %s68, %s82
      %p84 = scmp.eq.s32.totalorder %s23, 0
      %p85 = por %p83, %p84
      %s87 = sadd.s32 %s86, 1
      %p90 = scmp.eq.s32.totalorder %s17, 1
      %p91 = scmp.ne.s32.totalorder %s86, %s88
      %p92 = scmp.eq.s32.totalorder %s17, 0
      %p93 = por %p91, %p92
      %p94 = scmp.ne.s32.totalorder %s86, %s88
      %p95 = scmp.eq.s32.totalorder %s22, 1
      %p96 = por %p94, %p95
      %p97 = scmp.ne.s32.totalorder %s88, %s89
      %p98 = scmp.eq.s32.totalorder %s22, 0
      %p99 = por %p97, %p98
      %p100 = scmp.ne.s32.totalorder %s88, %s89
      %p101 = scmp.eq.s32.totalorder %s23, 1
      %p102 = por %p100, %p101
      %p104 = scmp.ne.s32.totalorder %s89, %s103
      %p105 = scmp.eq.s32.totalorder %s23, 0
      %p106 = por %p104, %p105
      %s108 = sadd.s32 %s107, 1
      %p111 = scmp.eq.s32.totalorder %s17, 1
      %p112 = scmp.ne.s32.totalorder %s107, %s109
      %p113 = scmp.eq.s32.totalorder %s17, 0
      %p114 = por %p112, %p113
      %p115 = scmp.ne.s32.totalorder %s107, %s109
      %p116 = scmp.eq.s32.totalorder %s22, 1
      %p117 = por %p115, %p116
      %p118 = scmp.ne.s32.totalorder %s109, %s110
      %p119 = scmp.eq.s32.totalorder %s22, 0
      %p120 = por %p118, %p119
      %p121 = scmp.ne.s32.totalorder %s109, %s110
      %p122 = scmp.eq.s32.totalorder %s23, 1
      %p123 = por %p121, %p122
      %p125 = scmp.ne.s32.totalorder %s110, %s124
      %p126 = scmp.eq.s32.totalorder %s23, 0
      %p127 = por %p125, %p126
      %s129 = sadd.s32 %s128, 1
      %p132 = scmp.eq.s32.totalorder %s17, 1
      %p133 = scmp.ne.s32.totalorder %s128, %s130
      %p134 = scmp.eq.s32.totalorder %s17, 0
      %p135 = por %p133, %p134
      %p136 = scmp.ne.s32.totalorder %s128, %s130
      %p137 = scmp.eq.s32.totalorder %s22, 1
      %p138 = por %p136, %p137
      %p139 = scmp.ne.s32.totalorder %s130, %s131
      %p140 = scmp.eq.s32.totalorder %s22, 0
      %p141 = por %p139, %p140
      %p142 = scmp.ne.s32.totalorder %s130, %s131
      %p143 = scmp.eq.s32.totalorder %s23, 1
      %p144 = por %p142, %p143
      %p146 = scmp.ne.s32.totalorder %s131, %s145
      %p147 = scmp.eq.s32.totalorder %s23, 0
      %p148 = por %p146, %p147
      %s150 = sadd.s32 %s149, 1
      %p153 = scmp.eq.s32.totalorder %s17, 1
      %p154 = scmp.ne.s32.totalorder %s149, %s151
      %p155 = scmp.eq.s32.totalorder %s17, 0
      %p156 = por %p154, %p155
      %p157 = scmp.ne.s32.totalorder %s149, %s151
      %p158 = scmp.eq.s32.totalorder %s22, 1
      %p159 = por %p157, %p158
      %p160 = scmp.ne.s32.totalorder %s151, %s152
      %p161 = scmp.eq.s32.totalorder %s22, 0
      %p162 = por %p160, %p161
      %p163 = scmp.ne.s32.totalorder %s151, %s152
      %p164 = scmp.eq.s32.totalorder %s23, 1
      %p165 = por %p163, %p164
      %p167 = scmp.ne.s32.totalorder %s152, %s166
      %p168 = scmp.eq.s32.totalorder %s23, 0
      %p169 = por %p167, %p168
      %s171 = sadd.s32 %s170, 1
      %p174 = scmp.eq.s32.totalorder %s17, 1
      %p175 = scmp.ne.s32.totalorder %s170, %s172
      %p176 = scmp.eq.s32.totalorder %s17, 0
      %p177 = por %p175, %p176
      %p178 = scmp.ne.s32.totalorder %s170, %s172
      %p179 = scmp.eq.s32.totalorder %s22, 1
      %p180 = por %p178, %p179
      %p181 = scmp.ne.s32.totalorder %s172, %s173
      %p182 = scmp.eq.s32.totalorder %s22, 0
      %p183 = por %p181, %p182
      %p184 = scmp.ne.s32.totalorder %s172, %s173
      %p185 = scmp.eq.s32.totalorder %s23, 1
      %p186 = por %p184, %p185
      %p188 = scmp.ne.s32.totalorder %s173, %s187
      %p189 = scmp.eq.s32.totalorder %s23, 0
      %p190 = por %p188, %p189
      %s191 = ssub.s32 %s24, %s36
      %s192 = ssub.s32 %s25, %s32
      %s193 = sor.u32 %s191, %s192
      %p194 = scmp.eq.s32.totalorder %s193, 0
      %s196 = sadd.s32 %s195, 1
      %s197 = scalar_select %p194, %s195, %s196
      %p200 = pneg %p194
      %p201 = scmp.eq.s32.totalorder %s17, 1
      %p202 = por %p200, %p201
      %p203 = scmp.ne.s32.totalorder %s195, %s198
      %p204 = scmp.eq.s32.totalorder %s17, 0
      %p205 = por %p203, %p204
      %p206 = scmp.ne.s32.totalorder %s195, %s198
      %p207 = scmp.eq.s32.totalorder %s22, 1
      %p208 = por %p206, %p207
      %p209 = scmp.ne.s32.totalorder %s198, %s199
      %p210 = scmp.eq.s32.totalorder %s22, 0
      %p211 = por %p209, %p210
      %p212 = scmp.ne.s32.totalorder %s198, %s199
      %p213 = scmp.eq.s32.totalorder %s23, 1
      %p214 = por %p212, %p213
      %p216 = scmp.ne.s32.totalorder %s199, %s215
      %p217 = scmp.eq.s32.totalorder %s23, 0
      %p218 = por %p216, %p217
      %p219 = scmp.le.s32.totalorder 1, %s17
      %p220 = scmp.lt.s32.totalorder %s17, 3
      %p221 = pnand %p219, %p220
      %p222 = pneg %p221
      // Predicated region
      $region9: #{tpu_custom_call.1} parent=5 // pred_check
        _
      $region10: #{tpu_custom_call.1} parent=5 // pred_check_branch
        %224 = sbr.rel (%p221) target = $region12
      $region11: #{tpu_custom_call.1} parent=5 // pred_region
        %s225 = ssub.s32 %s17, 1
        // Predicated region
        $region13: #{tpu_custom_call.1} parent=11 // pred_check
          %p226 = pneg %p78
        $region14: #{tpu_custom_call.1} parent=11 // pred_check_branch
          %228 = sbr.rel (%p226) target = $region16
        $region15: #{tpu_custom_call.1} parent=11 // pred_region
          _
        $region16: #{tpu_custom_call.1} parent=11 // pred_fallthru
          _
        // Predicated region
        $region17: #{tpu_custom_call.1} parent=11 // pred_check
          %p229 = pneg %p99
        $region18: #{tpu_custom_call.1} parent=11 // pred_check_branch
          %231 = sbr.rel (%p229) target = $region20
        $region19: #{tpu_custom_call.1} parent=11 // pred_region
          _
        $region20: #{tpu_custom_call.1} parent=11 // pred_fallthru
          _
        // Predicated region
        $region21: #{tpu_custom_call.1} parent=11 // pred_check
          %p232 = pneg %p120
        $region22: #{tpu_custom_call.1} parent=11 // pred_check_branch
          %234 = sbr.rel (%p232) target = $region24
        $region23: #{tpu_custom_call.1} parent=11 // pred_region
          %s236 = ssub.s32 8192, 8192
          %237 = vsyncadd [#allocation3], %s236
          %s238 = sshll.u32 [#allocation2], 4
          %s239 = int_to_ptr.vmem [resolvable:$true] %s238
          %244 = dma.hbm_to_vmem [thread:$0]  %s3, 8192, %s239, [#allocation3], 256, 256, 16
        $region24: #{tpu_custom_call.1} parent=11 // pred_fallthru
          _
        // Predicated region
        $region25: #{tpu_custom_call.1} parent=11 // pred_check
          %p245 = pneg %p141
        $region26: #{tpu_custom_call.1} parent=11 // pred_check_branch
          %247 = sbr.rel (%p245) target = $region28
        $region27: #{tpu_custom_call.1} parent=11 // pred_region
          _
        $region28: #{tpu_custom_call.1} parent=11 // pred_fallthru
          _
        // Predicated region
        $region29: #{tpu_custom_call.1} parent=11 // pred_check
          %p248 = pneg %p162
        $region30: #{tpu_custom_call.1} parent=11 // pred_check_branch
          %250 = sbr.rel (%p248) target = $region32
        $region31: #{tpu_custom_call.1} parent=11 // pred_region
          _
        $region32: #{tpu_custom_call.1} parent=11 // pred_fallthru
          _
        // Predicated region
        $region33: #{tpu_custom_call.1} parent=11 // pred_check
          %p251 = pneg %p183
        $region34: #{tpu_custom_call.1} parent=11 // pred_check_branch
          %253 = sbr.rel (%p251) target = $region36
        $region35: #{tpu_custom_call.1} parent=11 // pred_region
          _
        $region36: #{tpu_custom_call.1} parent=11 // pred_fallthru
          _
      $region12: #{tpu_custom_call.1} parent=5 // pred_fallthru
        _
      %p254 = scmp.lt.s32.totalorder %s17, 2
      // Predicated region
      $region37: #{tpu_custom_call.1} parent=5 // pred_check
        %p255 = pneg %p254
      $region38: #{tpu_custom_call.1} parent=5 // pred_check_branch
        %257 = sbr.rel (%p255) target = $region40
      $region39: #{tpu_custom_call.1} parent=5 // pred_region
        // Predicated region
        $region41: #{tpu_custom_call.1} parent=39 // pred_check
          %p258 = pneg %p51
        $region42: #{tpu_custom_call.1} parent=39 // pred_check_branch
          %260 = sbr.rel (%p258) target = $region44
        $region43: #{tpu_custom_call.1} parent=39 // pred_region
          %s261 = smul.u32 2, %s25
          %p262 = scmp.lt.s32.totalorder %s24, 1
          %s263 = scalar_select %p262, %s24, 1
          %p264 = scmp.lt.s32.totalorder %s261, 1
          %s265 = scalar_select %p264, %s261, 1
          %s266 = smul.addr %s263, 32
          %s267 = sadd.s32 %s265, %s266
          %s268 = smul.addr %s267, 8
          %s269 = scalar_lea.vmem %s0, %s268
          %s270 = smul.u32 2, %s25
        $region44: #{tpu_custom_call.1} parent=39 // pred_fallthru
          _
      $region40: #{tpu_custom_call.1} parent=5 // pred_fallthru
        _
      %p271 = scmp.le.s32.totalorder 1, %s17
      %p272 = scmp.lt.s32.totalorder %s17, 3
      %p273 = pnand %p271, %p272
      %p274 = pneg %p273
      // Predicated region
      $region45: #{tpu_custom_call.1} parent=5 // pred_check
        _
      $region46: #{tpu_custom_call.1} parent=5 // pred_check_branch
        %276 = sbr.rel (%p273) target = $region48
      $region47: #{tpu_custom_call.1} parent=5 // pred_region
        %s277 = ssub.s32 %s17, 1
        // Predicated region
        $region49: #{tpu_custom_call.1} parent=47 // pred_check
          %p278 = pneg %p120
        $region50: #{tpu_custom_call.1} parent=47 // pred_check_branch
          %280 = sbr.rel (%p278) target = $region52
        $region51: #{tpu_custom_call.1} parent=47 // pred_region
          %281 = dma.done [#allocation3], 8192
        $region52: #{tpu_custom_call.1} parent=47 // pred_fallthru
          _
        %s282 = smul.u32 2, %s27
        %p283 = scmp.lt.s32.totalorder %s26, 1
        %s284 = scalar_select %p283, %s26, 1
        %p285 = scmp.lt.s32.totalorder %s282, 1
        %s286 = scalar_select %p285, %s282, 1
        %s287 = smul.addr %s284, 32
        %s288 = sadd.s32 %s286, %s287
        %s289 = smul.addr %s288, 8
        %s290 = scalar_lea.vmem %s0, %s289
        %p291 = pneg %p57
        %p292 = pneg %p54
        %p293 = pneg %p78
        %p294 = pneg %p75
        %p295 = pneg %p99
        %p296 = pneg %p96
        %p297 = pneg %p120
        %p298 = pneg %p117
        %p299 = pneg %p141
        %p300 = pneg %p138
        %p301 = pneg %p162
        %p302 = pneg %p159
        %p303 = pneg %p183
        %p304 = pneg %p180
        %p305 = pneg %p211
        %p306 = pneg %p208
        %s307 = sand.u32 %s198, 1
        %s308 = scalar_lea.sflag [#allocation4], %s307
        %s309 = sand.u32 %s198, 1
        %s310 = smul.addr %s309, 16
        %s311 = scalar_lea.vmem [#allocation5], %s310
        %s312 = smul.u32 2, %s27
        %p313 = scmp.lt.s32.totalorder %s26, 1
        %s314 = scalar_select %p313, %s26, 1
        %p315 = scmp.lt.s32.totalorder %s312, 1
        %s316 = scalar_select %p315, %s312, 1
        %s317 = smul.addr %s314, 32
        %s318 = sadd.s32 %s316, %s317
        %s319 = smul.addr %s318, 8
        %s320 = scalar_lea.vmem %s0, %s319
        %s321 = smul.u32 2, %s27
        %s322 = smul.u32 2, %s27
        %v324 = vld [vmem:[%s320] sm:$0xff]
        %v325 = vld [vmem:[%s320 + $0x8] sm:$0xff]
        %v326 = vld [vmem:[%s320 + $0x10] sm:$0xff]
        %v327 = vld [vmem:[%s320 + $0x18] sm:$0xff]
        %v328 = vld [vmem:[%s320 + $0x20] sm:$0xff]
        %v329 = vld [vmem:[%s320 + $0x28] sm:$0xff]
        %v330 = vld [vmem:[%s320 + $0x30] sm:$0xff]
        %v331 = vld [vmem:[%s320 + $0x38] sm:$0xff]
        %v332 = vld [vmem:[%s320 + $0x40] sm:$0xff]
        %v333 = vld [vmem:[%s320 + $0x48] sm:$0xff]
        %v334 = vld [vmem:[%s320 + $0x50] sm:$0xff]
        %v335 = vld [vmem:[%s320 + $0x58] sm:$0xff]
        %v336 = vld [vmem:[%s320 + $0x60] sm:$0xff]
        %v337 = vld [vmem:[%s320 + $0x68] sm:$0xff]
        %v338 = vld [vmem:[%s320 + $0x70] sm:$0xff]
        %v339 = vld [vmem:[%s320 + $0x78] sm:$0xff]
        %v340 = vld [vmem:[%s320 + $0x80] sm:$0xff]
        %v341 = vld [vmem:[%s320 + $0x88] sm:$0xff]
        %v342 = vld [vmem:[%s320 + $0x90] sm:$0xff]
        %v343 = vld [vmem:[%s320 + $0x98] sm:$0xff]
        %v344 = vld [vmem:[%s320 + $0xa0] sm:$0xff]
        %v345 = vld [vmem:[%s320 + $0xa8] sm:$0xff]
        %v346 = vld [vmem:[%s320 + $0xb0] sm:$0xff]
        %v347 = vld [vmem:[%s320 + $0xb8] sm:$0xff]
        %v348 = vld [vmem:[%s320 + $0xc0] sm:$0xff]
        %v349 = vld [vmem:[%s320 + $0xc8] sm:$0xff]
        %v350 = vld [vmem:[%s320 + $0xd0] sm:$0xff]
        %v351 = vld [vmem:[%s320 + $0xd8] sm:$0xff]
        %v352 = vld [vmem:[%s320 + $0xe0] sm:$0xff]
        %v353 = vld [vmem:[%s320 + $0xe8] sm:$0xff]
        %v354 = vld [vmem:[%s320 + $0xf0] sm:$0xff]
        %v355 = vld [vmem:[%s320 + $0xf8] sm:$0xff]
        %v356 = vpack.c.bf16 %v326, %v324
        %v357 = vpack.c.bf16 %v327, %v325
        %v358 = vpack.c.bf16 %v330, %v328
        %v359 = vpack.c.bf16 %v331, %v329
        %v360 = vpack.c.bf16 %v334, %v332
        %v361 = vpack.c.bf16 %v335, %v333
        %v362 = vpack.c.bf16 %v338, %v336
        %v363 = vpack.c.bf16 %v339, %v337
        %v364 = vpack.c.bf16 %v342, %v340
        %v365 = vpack.c.bf16 %v343, %v341
        %v366 = vpack.c.bf16 %v346, %v344
        %v367 = vpack.c.bf16 %v347, %v345
        %v368 = vpack.c.bf16 %v350, %v348
        %v369 = vpack.c.bf16 %v351, %v349
        %v370 = vpack.c.bf16 %v354, %v352
        %v371 = vpack.c.bf16 %v355, %v353
        %v372 = vld [vmem:[%s1] sm:$0xf]
        %v373 = vld [vmem:[%s1 + $0x4] sm:$0xf]
        %v374 = vld [vmem:[%s1 + $0x8] sm:$0xf]
        %v375 = vld [vmem:[%s1 + $0xc] sm:$0xf]
        %v376 = vld [vmem:[%s1 + $0x10] sm:$0xf]
        %v377 = vld [vmem:[%s1 + $0x14] sm:$0xf]
        %v378 = vld [vmem:[%s1 + $0x18] sm:$0xf]
        %v379 = vld [vmem:[%s1 + $0x1c] sm:$0xf]
        %v380 = vld [vmem:[%s1 + $0x20] sm:$0xf]
        %v381 = vld [vmem:[%s1 + $0x24] sm:$0xf]
        %v382 = vld [vmem:[%s1 + $0x28] sm:$0xf]
        %v383 = vld [vmem:[%s1 + $0x2c] sm:$0xf]
        %v384 = vld [vmem:[%s1 + $0x30] sm:$0xf]
        %v385 = vld [vmem:[%s1 + $0x34] sm:$0xf]
        %v386 = vld [vmem:[%s1 + $0x38] sm:$0xf]
        %v387 = vld [vmem:[%s1 + $0x3c] sm:$0xf]
        %v388 = vld [vmem:[%s1 + $0x40] sm:$0xf]
        %v389 = vld [vmem:[%s1 + $0x44] sm:$0xf]
        %v390 = vld [vmem:[%s1 + $0x48] sm:$0xf]
        %v391 = vld [vmem:[%s1 + $0x4c] sm:$0xf]
        %v392 = vld [vmem:[%s1 + $0x50] sm:$0xf]
        %v393 = vld [vmem:[%s1 + $0x54] sm:$0xf]
        %v394 = vld [vmem:[%s1 + $0x58] sm:$0xf]
        %v395 = vld [vmem:[%s1 + $0x5c] sm:$0xf]
        %v396 = vld [vmem:[%s1 + $0x60] sm:$0xf]
        %v397 = vld [vmem:[%s1 + $0x64] sm:$0xf]
        %v398 = vld [vmem:[%s1 + $0x68] sm:$0xf]
        %v399 = vld [vmem:[%s1 + $0x6c] sm:$0xf]
        %v400 = vld [vmem:[%s1 + $0x70] sm:$0xf]
        %v401 = vld [vmem:[%s1 + $0x74] sm:$0xf]
        %v402 = vld [vmem:[%s1 + $0x78] sm:$0xf]
        %v403 = vld [vmem:[%s1 + $0x7c] sm:$0xf]
        %v404 = vld [vmem:[%s1 + $0x80] sm:$0xf]
        %v405 = vld [vmem:[%s1 + $0x84] sm:$0xf]
        %v406 = vld [vmem:[%s1 + $0x88] sm:$0xf]
        %v407 = vld [vmem:[%s1 + $0x8c] sm:$0xf]
        %v408 = vld [vmem:[%s1 + $0x90] sm:$0xf]
        %v409 = vld [vmem:[%s1 + $0x94] sm:$0xf]
        %v410 = vld [vmem:[%s1 + $0x98] sm:$0xf]
        %v411 = vld [vmem:[%s1 + $0x9c] sm:$0xf]
        %v412 = vld [vmem:[%s1 + $0xa0] sm:$0xf]
        %v413 = vld [vmem:[%s1 + $0xa4] sm:$0xf]
        %v414 = vld [vmem:[%s1 + $0xa8] sm:$0xf]
        %v415 = vld [vmem:[%s1 + $0xac] sm:$0xf]
        %v416 = vld [vmem:[%s1 + $0xb0] sm:$0xf]
        %v417 = vld [vmem:[%s1 + $0xb4] sm:$0xf]
        %v418 = vld [vmem:[%s1 + $0xb8] sm:$0xf]
        %v419 = vld [vmem:[%s1 + $0xbc] sm:$0xf]
        %v420 = vld [vmem:[%s1 + $0xc0] sm:$0xf]
        %v421 = vld [vmem:[%s1 + $0xc4] sm:$0xf]
        %v422 = vld [vmem:[%s1 + $0xc8] sm:$0xf]
        %v423 = vld [vmem:[%s1 + $0xcc] sm:$0xf]
        %v424 = vld [vmem:[%s1 + $0xd0] sm:$0xf]
        %v425 = vld [vmem:[%s1 + $0xd4] sm:$0xf]
        %v426 = vld [vmem:[%s1 + $0xd8] sm:$0xf]
        %v427 = vld [vmem:[%s1 + $0xdc] sm:$0xf]
        %v428 = vld [vmem:[%s1 + $0xe0] sm:$0xf]
        %v429 = vld [vmem:[%s1 + $0xe4] sm:$0xf]
        %v430 = vld [vmem:[%s1 + $0xe8] sm:$0xf]
        %v431 = vld [vmem:[%s1 + $0xec] sm:$0xf]
        %v432 = vld [vmem:[%s1 + $0xf0] sm:$0xf]
        %v433 = vld [vmem:[%s1 + $0xf4] sm:$0xf]
        %v434 = vld [vmem:[%s1 + $0xf8] sm:$0xf]
        %v435 = vld [vmem:[%s1 + $0xfc] sm:$0xf]
        %v436 = vld [vmem:[%s2] sm:$0xff]
        %v437 = vld [vmem:[%s2 + $0x8] sm:$0xff]
        %v438 = vld [vmem:[%s2 + $0x10] sm:$0xff]
        %v439 = vld [vmem:[%s2 + $0x18] sm:$0xff]
        %v440 = vld [vmem:[%s2 + $0x20] sm:$0xff]
        %v441 = vld [vmem:[%s2 + $0x28] sm:$0xff]
        %v442 = vld [vmem:[%s2 + $0x30] sm:$0xff]
        %v443 = vld [vmem:[%s2 + $0x38] sm:$0xff]
        %v444 = vld [vmem:[%s2 + $0x40] sm:$0xff]
        %v445 = vld [vmem:[%s2 + $0x48] sm:$0xff]
        %v446 = vld [vmem:[%s2 + $0x50] sm:$0xff]
        %v447 = vld [vmem:[%s2 + $0x58] sm:$0xff]
        %v448 = vld [vmem:[%s2 + $0x60] sm:$0xff]
        %v449 = vld [vmem:[%s2 + $0x68] sm:$0xff]
        %v450 = vld [vmem:[%s2 + $0x70] sm:$0xff]
        %v451 = vld [vmem:[%s2 + $0x78] sm:$0xff]
        %v452 = vld [vmem:[%s2 + $0x80] sm:$0xff]
        %v453 = vld [vmem:[%s2 + $0x88] sm:$0xff]
        %v454 = vld [vmem:[%s2 + $0x90] sm:$0xff]
        %v455 = vld [vmem:[%s2 + $0x98] sm:$0xff]
        %v456 = vld [vmem:[%s2 + $0xa0] sm:$0xff]
        %v457 = vld [vmem:[%s2 + $0xa8] sm:$0xff]
        %v458 = vld [vmem:[%s2 + $0xb0] sm:$0xff]
        %v459 = vld [vmem:[%s2 + $0xb8] sm:$0xff]
        %v460 = vld [vmem:[%s2 + $0xc0] sm:$0xff]
        %v461 = vld [vmem:[%s2 + $0xc8] sm:$0xff]
        %v462 = vld [vmem:[%s2 + $0xd0] sm:$0xff]
        %v463 = vld [vmem:[%s2 + $0xd8] sm:$0xff]
        %v464 = vld [vmem:[%s2 + $0xe0] sm:$0xff]
        %v465 = vld [vmem:[%s2 + $0xe8] sm:$0xff]
        %v466 = vld [vmem:[%s2 + $0xf0] sm:$0xff]
        %v467 = vld [vmem:[%s2 + $0xf8] sm:$0xff]
        %v468 = vld [vmem:[%s2 + $0x100] sm:$0xff]
        %v469 = vld [vmem:[%s2 + $0x108] sm:$0xff]
        %v470 = vld [vmem:[%s2 + $0x110] sm:$0xff]
        %v471 = vld [vmem:[%s2 + $0x118] sm:$0xff]
        %v472 = vld [vmem:[%s2 + $0x120] sm:$0xff]
        %v473 = vld [vmem:[%s2 + $0x128] sm:$0xff]
        %v474 = vld [vmem:[%s2 + $0x130] sm:$0xff]
        %v475 = vld [vmem:[%s2 + $0x138] sm:$0xff]
        %v476 = vld [vmem:[%s2 + $0x140] sm:$0xff]
        %v477 = vld [vmem:[%s2 + $0x148] sm:$0xff]
        %v478 = vld [vmem:[%s2 + $0x150] sm:$0xff]
        %v479 = vld [vmem:[%s2 + $0x158] sm:$0xff]
        %v480 = vld [vmem:[%s2 + $0x160] sm:$0xff]
        %v481 = vld [vmem:[%s2 + $0x168] sm:$0xff]
        %v482 = vld [vmem:[%s2 + $0x170] sm:$0xff]
        %v483 = vld [vmem:[%s2 + $0x178] sm:$0xff]
        %v484 = vld [vmem:[%s2 + $0x180] sm:$0xff]
        %v485 = vld [vmem:[%s2 + $0x188] sm:$0xff]
        %v486 = vld [vmem:[%s2 + $0x190] sm:$0xff]
        %v487 = vld [vmem:[%s2 + $0x198] sm:$0xff]
        %v488 = vld [vmem:[%s2 + $0x1a0] sm:$0xff]
        %v489 = vld [vmem:[%s2 + $0x1a8] sm:$0xff]
        %v490 = vld [vmem:[%s2 + $0x1b0] sm:$0xff]
        %v491 = vld [vmem:[%s2 + $0x1b8] sm:$0xff]
        %v492 = vld [vmem:[%s2 + $0x1c0] sm:$0xff]
        %v493 = vld [vmem:[%s2 + $0x1c8] sm:$0xff]
        %v494 = vld [vmem:[%s2 + $0x1d0] sm:$0xff]
        %v495 = vld [vmem:[%s2 + $0x1d8] sm:$0xff]
        %v496 = vld [vmem:[%s2 + $0x1e0] sm:$0xff]
        %v497 = vld [vmem:[%s2 + $0x1e8] sm:$0xff]
        %v498 = vld [vmem:[%s2 + $0x1f0] sm:$0xff]
        %v499 = vld [vmem:[%s2 + $0x1f8] sm:$0xff]
        %501 = vset.pattern.permute.xlu0 0
        %502 = vperm.xlu0 %501, %v436
        %v503 = vpop.permute.xlu0 %502
        %506 = vset.pattern.permute.xlu0 0
        %507 = vperm.xlu0 %506, %v437
        %v508 = vpop.permute.xlu0 %507
        %511 = vset.pattern.permute.xlu0 0
        %512 = vperm.xlu0 %511, %v438
        %v513 = vpop.permute.xlu0 %512
        %516 = vset.pattern.permute.xlu0 0
        %517 = vperm.xlu0 %516, %v439
        %v518 = vpop.permute.xlu0 %517
        %521 = vset.pattern.permute.xlu0 0
        %522 = vperm.xlu0 %521, %v440
        %v523 = vpop.permute.xlu0 %522
        %526 = vset.pattern.permute.xlu0 0
        %527 = vperm.xlu0 %526, %v441
        %v528 = vpop.permute.xlu0 %527
        %531 = vset.pattern.permute.xlu0 0
        %532 = vperm.xlu0 %531, %v442
        %v533 = vpop.permute.xlu0 %532
        %536 = vset.pattern.permute.xlu0 0
        %537 = vperm.xlu0 %536, %v443
        %v538 = vpop.permute.xlu0 %537
        %541 = vset.pattern.permute.xlu0 0
        %542 = vperm.xlu0 %541, %v444
        %v543 = vpop.permute.xlu0 %542
        %546 = vset.pattern.permute.xlu0 0
        %547 = vperm.xlu0 %546, %v445
        %v548 = vpop.permute.xlu0 %547
        %551 = vset.pattern.permute.xlu0 0
        %552 = vperm.xlu0 %551, %v446
        %v553 = vpop.permute.xlu0 %552
        %556 = vset.pattern.permute.xlu0 0
        %557 = vperm.xlu0 %556, %v447
        %v558 = vpop.permute.xlu0 %557
        %561 = vset.pattern.permute.xlu0 0
        %562 = vperm.xlu0 %561, %v448
        %v563 = vpop.permute.xlu0 %562
        %566 = vset.pattern.permute.xlu0 0
        %567 = vperm.xlu0 %566, %v449
        %v568 = vpop.permute.xlu0 %567
        %571 = vset.pattern.permute.xlu0 0
        %572 = vperm.xlu0 %571, %v450
        %v573 = vpop.permute.xlu0 %572
        %576 = vset.pattern.permute.xlu0 0
        %577 = vperm.xlu0 %576, %v451
        %v578 = vpop.permute.xlu0 %577
        %581 = vset.pattern.permute.xlu0 0
        %582 = vperm.xlu0 %581, %v452
        %v583 = vpop.permute.xlu0 %582
        %586 = vset.pattern.permute.xlu0 0
        %587 = vperm.xlu0 %586, %v453
        %v588 = vpop.permute.xlu0 %587
        %591 = vset.pattern.permute.xlu0 0
        %592 = vperm.xlu0 %591, %v454
        %v593 = vpop.permute.xlu0 %592
        %596 = vset.pattern.permute.xlu0 0
        %597 = vperm.xlu0 %596, %v455
        %v598 = vpop.permute.xlu0 %597
        %601 = vset.pattern.permute.xlu0 0
        %602 = vperm.xlu0 %601, %v456
        %v603 = vpop.permute.xlu0 %602
        %606 = vset.pattern.permute.xlu0 0
        %607 = vperm.xlu0 %606, %v457
        %v608 = vpop.permute.xlu0 %607
        %611 = vset.pattern.permute.xlu0 0
        %612 = vperm.xlu0 %611, %v458
        %v613 = vpop.permute.xlu0 %612
        %616 = vset.pattern.permute.xlu0 0
        %617 = vperm.xlu0 %616, %v459
        %v618 = vpop.permute.xlu0 %617
        %621 = vset.pattern.permute.xlu0 0
        %622 = vperm.xlu0 %621, %v460
        %v623 = vpop.permute.xlu0 %622
        %626 = vset.pattern.permute.xlu0 0
        %627 = vperm.xlu0 %626, %v461
        %v628 = vpop.permute.xlu0 %627
        %631 = vset.pattern.permute.xlu0 0
        %632 = vperm.xlu0 %631, %v462
        %v633 = vpop.permute.xlu0 %632
        %636 = vset.pattern.permute.xlu0 0
        %637 = vperm.xlu0 %636, %v463
        %v638 = vpop.permute.xlu0 %637
        %641 = vset.pattern.permute.xlu0 0
        %642 = vperm.xlu0 %641, %v464
        %v643 = vpop.permute.xlu0 %642
        %646 = vset.pattern.permute.xlu0 0
        %647 = vperm.xlu0 %646, %v465
        %v648 = vpop.permute.xlu0 %647
        %651 = vset.pattern.permute.xlu0 0
        %652 = vperm.xlu0 %651, %v466
        %v653 = vpop.permute.xlu0 %652
        %656 = vset.pattern.permute.xlu0 0
        %657 = vperm.xlu0 %656, %v467
        %v658 = vpop.permute.xlu0 %657
        %661 = vset.pattern.permute.xlu0 0
        %662 = vperm.xlu0 %661, %v468
        %v663 = vpop.permute.xlu0 %662
        %666 = vset.pattern.permute.xlu0 0
        %667 = vperm.xlu0 %666, %v469
        %v668 = vpop.permute.xlu0 %667
        %671 = vset.pattern.permute.xlu0 0
        %672 = vperm.xlu0 %671, %v470
        %v673 = vpop.permute.xlu0 %672
        %676 = vset.pattern.permute.xlu0 0
        %677 = vperm.xlu0 %676, %v471
        %v678 = vpop.permute.xlu0 %677
        %681 = vset.pattern.permute.xlu0 0
        %682 = vperm.xlu0 %681, %v472
        %v683 = vpop.permute.xlu0 %682
        %686 = vset.pattern.permute.xlu0 0
        %687 = vperm.xlu0 %686, %v473
        %v688 = vpop.permute.xlu0 %687
        %691 = vset.pattern.permute.xlu0 0
        %692 = vperm.xlu0 %691, %v474
        %v693 = vpop.permute.xlu0 %692
        %696 = vset.pattern.permute.xlu0 0
        %697 = vperm.xlu0 %696, %v475
        %v698 = vpop.permute.xlu0 %697
        %701 = vset.pattern.permute.xlu0 0
        %702 = vperm.xlu0 %701, %v476
        %v703 = vpop.permute.xlu0 %702
        %706 = vset.pattern.permute.xlu0 0
        %707 = vperm.xlu0 %706, %v477
        %v708 = vpop.permute.xlu0 %707
        %711 = vset.pattern.permute.xlu0 0
        %712 = vperm.xlu0 %711, %v478
        %v713 = vpop.permute.xlu0 %712
        %716 = vset.pattern.permute.xlu0 0
        %717 = vperm.xlu0 %716, %v479
        %v718 = vpop.permute.xlu0 %717
        %721 = vset.pattern.permute.xlu0 0
        %722 = vperm.xlu0 %721, %v480
        %v723 = vpop.permute.xlu0 %722
        %726 = vset.pattern.permute.xlu0 0
        %727 = vperm.xlu0 %726, %v481
        %v728 = vpop.permute.xlu0 %727
        %731 = vset.pattern.permute.xlu0 0
        %732 = vperm.xlu0 %731, %v482
        %v733 = vpop.permute.xlu0 %732
        %736 = vset.pattern.permute.xlu0 0
        %737 = vperm.xlu0 %736, %v483
        %v738 = vpop.permute.xlu0 %737
        %741 = vset.pattern.permute.xlu0 0
        %742 = vperm.xlu0 %741, %v484
        %v743 = vpop.permute.xlu0 %742
        %746 = vset.pattern.permute.xlu0 0
        %747 = vperm.xlu0 %746, %v485
        %v748 = vpop.permute.xlu0 %747
        %751 = vset.pattern.permute.xlu0 0
        %752 = vperm.xlu0 %751, %v486
        %v753 = vpop.permute.xlu0 %752
        %756 = vset.pattern.permute.xlu0 0
        %757 = vperm.xlu0 %756, %v487
        %v758 = vpop.permute.xlu0 %757
        %761 = vset.pattern.permute.xlu0 0
        %762 = vperm.xlu0 %761, %v488
        %v763 = vpop.permute.xlu0 %762
        %766 = vset.pattern.permute.xlu0 0
        %767 = vperm.xlu0 %766, %v489
        %v768 = vpop.permute.xlu0 %767
        %771 = vset.pattern.permute.xlu0 0
        %772 = vperm.xlu0 %771, %v490
        %v773 = vpop.permute.xlu0 %772
        %776 = vset.pattern.permute.xlu0 0
        %777 = vperm.xlu0 %776, %v491
        %v778 = vpop.permute.xlu0 %777
        %781 = vset.pattern.permute.xlu0 0
        %782 = vperm.xlu0 %781, %v492
        %v783 = vpop.permute.xlu0 %782
        %786 = vset.pattern.permute.xlu0 0
        %787 = vperm.xlu0 %786, %v493
        %v788 = vpop.permute.xlu0 %787
        %791 = vset.pattern.permute.xlu0 0
        %792 = vperm.xlu0 %791, %v494
        %v793 = vpop.permute.xlu0 %792
        %796 = vset.pattern.permute.xlu0 0
        %797 = vperm.xlu0 %796, %v495
        %v798 = vpop.permute.xlu0 %797
        %801 = vset.pattern.permute.xlu0 0
        %802 = vperm.xlu0 %801, %v496
        %v803 = vpop.permute.xlu0 %802
        %806 = vset.pattern.permute.xlu0 0
        %807 = vperm.xlu0 %806, %v497
        %v808 = vpop.permute.xlu0 %807
        %811 = vset.pattern.permute.xlu0 0
        %812 = vperm.xlu0 %811, %v498
        %v813 = vpop.permute.xlu0 %812
        %816 = vset.pattern.permute.xlu0 0
        %817 = vperm.xlu0 %816, %v499
        %v818 = vpop.permute.xlu0 %817
        %v884 = vunpack.c.l.b16 %v372
        %v885 = vunpack.c.l.b16 %v373
        %v886 = vunpack.c.l.b16 %v374
        %v887 = vunpack.c.l.b16 %v375
        %v888 = vunpack.c.l.b16 %v376
        %v889 = vunpack.c.l.b16 %v377
        %v890 = vunpack.c.l.b16 %v378
        %v891 = vunpack.c.l.b16 %v379
        %v892 = vunpack.c.l.b16 %v380
        %v893 = vunpack.c.l.b16 %v381
        %v894 = vunpack.c.l.b16 %v382
        %v895 = vunpack.c.l.b16 %v383
        %v896 = vunpack.c.l.b16 %v384
        %v897 = vunpack.c.l.b16 %v385
        %v898 = vunpack.c.l.b16 %v386
        %v899 = vunpack.c.l.b16 %v387
        %v900 = vunpack.c.l.b16 %v388
        %v901 = vunpack.c.l.b16 %v389
        %v902 = vunpack.c.l.b16 %v390
        %v903 = vunpack.c.l.b16 %v391
        %v904 = vunpack.c.l.b16 %v392
        %v905 = vunpack.c.l.b16 %v393
        %v906 = vunpack.c.l.b16 %v394
        %v907 = vunpack.c.l.b16 %v395
        %v908 = vunpack.c.l.b16 %v396
        %v909 = vunpack.c.l.b16 %v397
        %v910 = vunpack.c.l.b16 %v398
        %v911 = vunpack.c.l.b16 %v399
        %v912 = vunpack.c.l.b16 %v400
        %v913 = vunpack.c.l.b16 %v401
        %v914 = vunpack.c.l.b16 %v402
        %v915 = vunpack.c.l.b16 %v403
        %v916 = vunpack.c.l.b16 %v404
        %v917 = vunpack.c.l.b16 %v405
        %v918 = vunpack.c.l.b16 %v406
        %v919 = vunpack.c.l.b16 %v407
        %v920 = vunpack.c.l.b16 %v408
        %v921 = vunpack.c.l.b16 %v409
        %v922 = vunpack.c.l.b16 %v410
        %v923 = vunpack.c.l.b16 %v411
        %v924 = vunpack.c.l.b16 %v412
        %v925 = vunpack.c.l.b16 %v413
        %v926 = vunpack.c.l.b16 %v414
        %v927 = vunpack.c.l.b16 %v415
        %v928 = vunpack.c.l.b16 %v416
        %v929 = vunpack.c.l.b16 %v417
        %v930 = vunpack.c.l.b16 %v418
        %v931 = vunpack.c.l.b16 %v419
        %v932 = vunpack.c.l.b16 %v420
        %v933 = vunpack.c.l.b16 %v421
        %v934 = vunpack.c.l.b16 %v422
        %v935 = vunpack.c.l.b16 %v423
        %v936 = vunpack.c.l.b16 %v424
        %v937 = vunpack.c.l.b16 %v425
        %v938 = vunpack.c.l.b16 %v426
        %v939 = vunpack.c.l.b16 %v427
        %v940 = vunpack.c.l.b16 %v428
        %v941 = vunpack.c.l.b16 %v429
        %v942 = vunpack.c.l.b16 %v430
        %v943 = vunpack.c.l.b16 %v431
        %v944 = vunpack.c.l.b16 %v432
        %v945 = vunpack.c.l.b16 %v433
        %v946 = vunpack.c.l.b16 %v434
        %v947 = vunpack.c.l.b16 %v435
        %v948 = vpack.c.b16 %v885, %v884
        %v949 = vpack.c.b16 %v887, %v886
        %v950 = vpack.c.b16 %v889, %v888
        %v951 = vpack.c.b16 %v891, %v890
        %v952 = vpack.c.b16 %v893, %v892
        %v953 = vpack.c.b16 %v895, %v894
        %v954 = vpack.c.b16 %v897, %v896
        %v955 = vpack.c.b16 %v899, %v898
        %v956 = vpack.c.b16 %v901, %v900
        %v957 = vpack.c.b16 %v903, %v902
        %v958 = vpack.c.b16 %v905, %v904
        %v959 = vpack.c.b16 %v907, %v906
        %v960 = vpack.c.b16 %v909, %v908
        %v961 = vpack.c.b16 %v911, %v910
        %v962 = vpack.c.b16 %v913, %v912
        %v963 = vpack.c.b16 %v915, %v914
        %v964 = vpack.c.b16 %v917, %v916
        %v965 = vpack.c.b16 %v919, %v918
        %v966 = vpack.c.b16 %v921, %v920
        %v967 = vpack.c.b16 %v923, %v922
        %v968 = vpack.c.b16 %v925, %v924
        %v969 = vpack.c.b16 %v927, %v926
        %v970 = vpack.c.b16 %v929, %v928
        %v971 = vpack.c.b16 %v931, %v930
        %v972 = vpack.c.b16 %v933, %v932
        %v973 = vpack.c.b16 %v935, %v934
        %v974 = vpack.c.b16 %v937, %v936
        %v975 = vpack.c.b16 %v939, %v938
        %v976 = vpack.c.b16 %v941, %v940
        %v977 = vpack.c.b16 %v943, %v942
        %v978 = vpack.c.b16 %v945, %v944
        %v979 = vpack.c.b16 %v947, %v946
        %1012 = vmatprep.subr.bf16.mxu0 %v371
        %1013 = vmatpush1.bf16.msra.mxu0 %v370
        %1014 = vmatprep.subr.bf16.mxu0 %v369
        %1015 = vmatpush1.bf16.msra.mxu0 %v368
        %1016 = vmatprep.subr.bf16.mxu0 %v367
        %1017 = vmatpush1.bf16.msra.mxu0 %v366
        %1018 = vmatprep.subr.bf16.mxu0 %v365
        %1019 = vmatpush1.bf16.msra.mxu0 %v364
        %1020 = vmatprep.subr.bf16.mxu0 %v363
        %1021 = vmatpush1.bf16.msra.mxu0 %v362
        %1022 = vmatprep.subr.bf16.mxu0 %v361
        %1023 = vmatpush1.bf16.msra.mxu0 %v360
        %1024 = vmatprep.subr.bf16.mxu0 %v359
        %1025 = vmatpush1.bf16.msra.mxu0 %v358
        %1026 = vmatprep.subr.bf16.mxu0 %v357
        %1027 = vmatpush1.bf16.msra.mxu0 %v356
        %1028 = vmatprep.subr.bf16.mxu0 0
        %1029 = vmatpush2.bf16.msra.mxu0 0
        %1030 = vmatprep.subr.bf16.mxu0 0
        %1031 = vmatpush2.bf16.msra.mxu0 0
        %1032 = vmatprep.subr.bf16.mxu0 0
        %1033 = vmatpush2.bf16.msra.mxu0 0
        %1034 = vmatprep.subr.bf16.mxu0 0
        %1035 = vmatpush2.bf16.msra.mxu0 0
        %1036 = vmatprep.subr.bf16.mxu0 0
        %1037 = vmatpush2.bf16.msra.mxu0 0
        %1038 = vmatprep.subr.bf16.mxu0 0
        %1039 = vmatpush2.bf16.msra.mxu0 0
        %1040 = vmatprep.subr.bf16.mxu0 0
        %1041 = vmatpush2.bf16.msra.mxu0 0
        %1042 = vmatprep.subr.bf16.mxu0 0
        %1043 = vmatpush2.bf16.msra.mxu0 0
        %1044 = vmatprep.mubr.bf16.mxu0 0
        %1045 = vmatmul.mubr.bf16.gmra.mxu0 %v948
        %v1046 = vpop.f32.mrf.mxu0
        %v1047 = vadd.f32 %v503, %v1046
        %v1048 = vpop.f32.mrf.mxu0
        %v1049 = vadd.f32 %v503, %v1048
        %v1050 = vpop.f32.mrf.mxu0
        %v1051 = vadd.f32 %v508, %v1050
        %v1052 = vpop.f32.mrf.mxu0
        %v1053 = vadd.f32 %v508, %v1052
        %1054 = vmatprep.mubr.bf16.mxu0 0
        %1055 = vmatmul.mubr.bf16.gmra.mxu0 %v949
        %v1056 = vpop.f32.mrf.mxu0
        %v1057 = vadd.f32 %v513, %v1056
        %v1058 = vpop.f32.mrf.mxu0
        %v1059 = vadd.f32 %v513, %v1058
        %v1060 = vpop.f32.mrf.mxu0
        %v1061 = vadd.f32 %v518, %v1060
        %v1062 = vpop.f32.mrf.mxu0
        %v1063 = vadd.f32 %v518, %v1062
        %1064 = vmatprep.mubr.bf16.mxu0 0
        %1065 = vmatmul.mubr.bf16.gmra.mxu0 %v950
        %v1066 = vpop.f32.mrf.mxu0
        %v1067 = vadd.f32 %v523, %v1066
        %v1068 = vpop.f32.mrf.mxu0
        %v1069 = vadd.f32 %v523, %v1068
        %v1070 = vpop.f32.mrf.mxu0
        %v1071 = vadd.f32 %v528, %v1070
        %v1072 = vpop.f32.mrf.mxu0
        %v1073 = vadd.f32 %v528, %v1072
        %1074 = vmatprep.mubr.bf16.mxu0 0
        %1075 = vmatmul.mubr.bf16.gmra.mxu0 %v951
        %v1076 = vpop.f32.mrf.mxu0
        %v1077 = vadd.f32 %v533, %v1076
        %v1078 = vpop.f32.mrf.mxu0
        %v1079 = vadd.f32 %v533, %v1078
        %v1080 = vpop.f32.mrf.mxu0
        %v1081 = vadd.f32 %v538, %v1080
        %v1082 = vpop.f32.mrf.mxu0
        %v1083 = vadd.f32 %v538, %v1082
        %1084 = vmatprep.mubr.bf16.mxu0 0
        %1085 = vmatmul.mubr.bf16.gmra.mxu0 %v952
        %v1086 = vpop.f32.mrf.mxu0
        %v1087 = vadd.f32 %v543, %v1086
        %v1088 = vpop.f32.mrf.mxu0
        %v1089 = vadd.f32 %v543, %v1088
        %v1090 = vpop.f32.mrf.mxu0
        %v1091 = vadd.f32 %v548, %v1090
        %v1092 = vpop.f32.mrf.mxu0
        %v1093 = vadd.f32 %v548, %v1092
        %1094 = vmatprep.mubr.bf16.mxu0 0
        %1095 = vmatmul.mubr.bf16.gmra.mxu0 %v953
        %v1096 = vpop.f32.mrf.mxu0
        %v1097 = vadd.f32 %v553, %v1096
        %v1098 = vpop.f32.mrf.mxu0
        %v1099 = vadd.f32 %v553, %v1098
        %v1100 = vpop.f32.mrf.mxu0
        %v1101 = vadd.f32 %v558, %v1100
        %v1102 = vpop.f32.mrf.mxu0
        %v1103 = vadd.f32 %v558, %v1102
        %1104 = vmatprep.mubr.bf16.mxu0 0
        %1105 = vmatmul.mubr.bf16.gmra.mxu0 %v954
        %v1106 = vpop.f32.mrf.mxu0
        %v1107 = vadd.f32 %v563, %v1106
        %v1108 = vpop.f32.mrf.mxu0
        %v1109 = vadd.f32 %v563, %v1108
        %v1110 = vpop.f32.mrf.mxu0
        %v1111 = vadd.f32 %v568, %v1110
        %v1112 = vpop.f32.mrf.mxu0
        %v1113 = vadd.f32 %v568, %v1112
        %1114 = vmatprep.mubr.bf16.mxu0 0
        %1115 = vmatmul.mubr.bf16.gmra.mxu0 %v955
        %v1116 = vpop.f32.mrf.mxu0
        %v1117 = vadd.f32 %v573, %v1116
        %v1118 = vpop.f32.mrf.mxu0
        %v1119 = vadd.f32 %v573, %v1118
        %v1120 = vpop.f32.mrf.mxu0
        %v1121 = vadd.f32 %v578, %v1120
        %v1122 = vpop.f32.mrf.mxu0
        %v1123 = vadd.f32 %v578, %v1122
        %1124 = vmatprep.mubr.bf16.mxu0 0
        %1125 = vmatmul.mubr.bf16.gmra.mxu0 %v956
        %v1126 = vpop.f32.mrf.mxu0
        %v1127 = vadd.f32 %v583, %v1126
        %v1128 = vpop.f32.mrf.mxu0
        %v1129 = vadd.f32 %v583, %v1128
        %v1130 = vpop.f32.mrf.mxu0
        %v1131 = vadd.f32 %v588, %v1130
        %v1132 = vpop.f32.mrf.mxu0
        %v1133 = vadd.f32 %v588, %v1132
        %1134 = vmatprep.mubr.bf16.mxu0 0
        %1135 = vmatmul.mubr.bf16.gmra.mxu0 %v957
        %v1136 = vpop.f32.mrf.mxu0
        %v1137 = vadd.f32 %v593, %v1136
        %v1138 = vpop.f32.mrf.mxu0
        %v1139 = vadd.f32 %v593, %v1138
        %v1140 = vpop.f32.mrf.mxu0
        %v1141 = vadd.f32 %v598, %v1140
        %v1142 = vpop.f32.mrf.mxu0
        %v1143 = vadd.f32 %v598, %v1142
        %1144 = vmatprep.mubr.bf16.mxu0 0
        %1145 = vmatmul.mubr.bf16.gmra.mxu0 %v958
        %v1146 = vpop.f32.mrf.mxu0
        %v1147 = vadd.f32 %v603, %v1146
        %v1148 = vpop.f32.mrf.mxu0
        %v1149 = vadd.f32 %v603, %v1148
        %v1150 = vpop.f32.mrf.mxu0
        %v1151 = vadd.f32 %v608, %v1150
        %v1152 = vpop.f32.mrf.mxu0
        %v1153 = vadd.f32 %v608, %v1152
        %1154 = vmatprep.mubr.bf16.mxu0 0
        %1155 = vmatmul.mubr.bf16.gmra.mxu0 %v959
        %v1156 = vpop.f32.mrf.mxu0
        %v1157 = vadd.f32 %v613, %v1156
        %v1158 = vpop.f32.mrf.mxu0
        %v1159 = vadd.f32 %v613, %v1158
        %v1160 = vpop.f32.mrf.mxu0
        %v1161 = vadd.f32 %v618, %v1160
        %v1162 = vpop.f32.mrf.mxu0
        %v1163 = vadd.f32 %v618, %v1162
        %1164 = vmatprep.mubr.bf16.mxu0 0
        %1165 = vmatmul.mubr.bf16.gmra.mxu0 %v960
        %v1166 = vpop.f32.mrf.mxu0
        %v1167 = vadd.f32 %v623, %v1166
        %v1168 = vpop.f32.mrf.mxu0
        %v1169 = vadd.f32 %v623, %v1168
        %v1170 = vpop.f32.mrf.mxu0
        %v1171 = vadd.f32 %v628, %v1170
        %v1172 = vpop.f32.mrf.mxu0
        %v1173 = vadd.f32 %v628, %v1172
        %1174 = vmatprep.mubr.bf16.mxu0 0
        %1175 = vmatmul.mubr.bf16.gmra.mxu0 %v961
        %v1176 = vpop.f32.mrf.mxu0
        %v1177 = vadd.f32 %v633, %v1176
        %v1178 = vpop.f32.mrf.mxu0
        %v1179 = vadd.f32 %v633, %v1178
        %v1180 = vpop.f32.mrf.mxu0
        %v1181 = vadd.f32 %v638, %v1180
        %v1182 = vpop.f32.mrf.mxu0
        %v1183 = vadd.f32 %v638, %v1182
        %1184 = vmatprep.mubr.bf16.mxu0 0
        %1185 = vmatmul.mubr.bf16.gmra.mxu0 %v962
        %v1186 = vpop.f32.mrf.mxu0
        %v1187 = vadd.f32 %v643, %v1186
        %v1188 = vpop.f32.mrf.mxu0
        %v1189 = vadd.f32 %v643, %v1188
        %v1190 = vpop.f32.mrf.mxu0
        %v1191 = vadd.f32 %v648, %v1190
        %v1192 = vpop.f32.mrf.mxu0
        %v1193 = vadd.f32 %v648, %v1192
        %1194 = vmatprep.mubr.bf16.mxu0 0
        %1195 = vmatmul.mubr.bf16.gmra.mxu0 %v963
        %v1196 = vpop.f32.mrf.mxu0
        %v1197 = vadd.f32 %v653, %v1196
        %v1198 = vpop.f32.mrf.mxu0
        %v1199 = vadd.f32 %v653, %v1198
        %v1200 = vpop.f32.mrf.mxu0
        %v1201 = vadd.f32 %v658, %v1200
        %v1202 = vpop.f32.mrf.mxu0
        %v1203 = vadd.f32 %v658, %v1202
        %1204 = vmatprep.mubr.bf16.mxu0 0
        %1205 = vmatmul.mubr.bf16.gmra.mxu0 %v964
        %v1206 = vpop.f32.mrf.mxu0
        %v1207 = vadd.f32 %v663, %v1206
        %v1208 = vpop.f32.mrf.mxu0
        %v1209 = vadd.f32 %v663, %v1208
        %v1210 = vpop.f32.mrf.mxu0
        %v1211 = vadd.f32 %v668, %v1210
        %v1212 = vpop.f32.mrf.mxu0
        %v1213 = vadd.f32 %v668, %v1212
        %1214 = vmatprep.mubr.bf16.mxu0 0
        %1215 = vmatmul.mubr.bf16.gmra.mxu0 %v965
        %v1216 = vpop.f32.mrf.mxu0
        %v1217 = vadd.f32 %v673, %v1216
        %v1218 = vpop.f32.mrf.mxu0
        %v1219 = vadd.f32 %v673, %v1218
        %v1220 = vpop.f32.mrf.mxu0
        %v1221 = vadd.f32 %v678, %v1220
        %v1222 = vpop.f32.mrf.mxu0
        %v1223 = vadd.f32 %v678, %v1222
        %1224 = vmatprep.mubr.bf16.mxu0 0
        %1225 = vmatmul.mubr.bf16.gmra.mxu0 %v966
        %v1226 = vpop.f32.mrf.mxu0
        %v1227 = vadd.f32 %v683, %v1226
        %v1228 = vpop.f32.mrf.mxu0
        %v1229 = vadd.f32 %v683, %v1228
        %v1230 = vpop.f32.mrf.mxu0
        %v1231 = vadd.f32 %v688, %v1230
        %v1232 = vpop.f32.mrf.mxu0
        %v1233 = vadd.f32 %v688, %v1232
        %1234 = vmatprep.mubr.bf16.mxu0 0
        %1235 = vmatmul.mubr.bf16.gmra.mxu0 %v967
        %v1236 = vpop.f32.mrf.mxu0
        %v1237 = vadd.f32 %v693, %v1236
        %v1238 = vpop.f32.mrf.mxu0
        %v1239 = vadd.f32 %v693, %v1238
        %v1240 = vpop.f32.mrf.mxu0
        %v1241 = vadd.f32 %v698, %v1240
        %v1242 = vpop.f32.mrf.mxu0
        %v1243 = vadd.f32 %v698, %v1242
        %1244 = vmatprep.mubr.bf16.mxu0 0
        %1245 = vmatmul.mubr.bf16.gmra.mxu0 %v968
        %v1246 = vpop.f32.mrf.mxu0
        %v1247 = vadd.f32 %v703, %v1246
        %v1248 = vpop.f32.mrf.mxu0
        %v1249 = vadd.f32 %v703, %v1248
        %v1250 = vpop.f32.mrf.mxu0
        %v1251 = vadd.f32 %v708, %v1250
        %v1252 = vpop.f32.mrf.mxu0
        %v1253 = vadd.f32 %v708, %v1252
        %1254 = vmatprep.mubr.bf16.mxu0 0
        %1255 = vmatmul.mubr.bf16.gmra.mxu0 %v969
        %v1256 = vpop.f32.mrf.mxu0
        %v1257 = vadd.f32 %v713, %v1256
        %v1258 = vpop.f32.mrf.mxu0
        %v1259 = vadd.f32 %v713, %v1258
        %v1260 = vpop.f32.mrf.mxu0
        %v1261 = vadd.f32 %v718, %v1260
        %v1262 = vpop.f32.mrf.mxu0
        %v1263 = vadd.f32 %v718, %v1262
        %1264 = vmatprep.mubr.bf16.mxu0 0
        %1265 = vmatmul.mubr.bf16.gmra.mxu0 %v970
        %v1266 = vpop.f32.mrf.mxu0
        %v1267 = vadd.f32 %v723, %v1266
        %v1268 = vpop.f32.mrf.mxu0
        %v1269 = vadd.f32 %v723, %v1268
        %v1270 = vpop.f32.mrf.mxu0
        %v1271 = vadd.f32 %v728, %v1270
        %v1272 = vpop.f32.mrf.mxu0
        %v1273 = vadd.f32 %v728, %v1272
        %1274 = vmatprep.mubr.bf16.mxu0 0
        %1275 = vmatmul.mubr.bf16.gmra.mxu0 %v971
        %v1276 = vpop.f32.mrf.mxu0
        %v1277 = vadd.f32 %v733, %v1276
        %v1278 = vpop.f32.mrf.mxu0
        %v1279 = vadd.f32 %v733, %v1278
        %v1280 = vpop.f32.mrf.mxu0
        %v1281 = vadd.f32 %v738, %v1280
        %v1282 = vpop.f32.mrf.mxu0
        %v1283 = vadd.f32 %v738, %v1282
        %1284 = vmatprep.mubr.bf16.mxu0 0
        %1285 = vmatmul.mubr.bf16.gmra.mxu0 %v972
        %v1286 = vpop.f32.mrf.mxu0
        %v1287 = vadd.f32 %v743, %v1286
        %v1288 = vpop.f32.mrf.mxu0
        %v1289 = vadd.f32 %v743, %v1288
        %v1290 = vpop.f32.mrf.mxu0
        %v1291 = vadd.f32 %v748, %v1290
        %v1292 = vpop.f32.mrf.mxu0
        %v1293 = vadd.f32 %v748, %v1292
        %1294 = vmatprep.mubr.bf16.mxu0 0
        %1295 = vmatmul.mubr.bf16.gmra.mxu0 %v973
        %v1296 = vpop.f32.mrf.mxu0
        %v1297 = vadd.f32 %v753, %v1296
        %v1298 = vpop.f32.mrf.mxu0
        %v1299 = vadd.f32 %v753, %v1298
        %v1300 = vpop.f32.mrf.mxu0
        %v1301 = vadd.f32 %v758, %v1300
        %v1302 = vpop.f32.mrf.mxu0
        %v1303 = vadd.f32 %v758, %v1302
        %1304 = vmatprep.mubr.bf16.mxu0 0
        %1305 = vmatmul.mubr.bf16.gmra.mxu0 %v974
        %v1306 = vpop.f32.mrf.mxu0
        %v1307 = vadd.f32 %v763, %v1306
        %v1308 = vpop.f32.mrf.mxu0
        %v1309 = vadd.f32 %v763, %v1308
        %v1310 = vpop.f32.mrf.mxu0
        %v1311 = vadd.f32 %v768, %v1310
        %v1312 = vpop.f32.mrf.mxu0
        %v1313 = vadd.f32 %v768, %v1312
        %1314 = vmatprep.mubr.bf16.mxu0 0
        %1315 = vmatmul.mubr.bf16.gmra.mxu0 %v975
        %v1316 = vpop.f32.mrf.mxu0
        %v1317 = vadd.f32 %v773, %v1316
        %v1318 = vpop.f32.mrf.mxu0
        %v1319 = vadd.f32 %v773, %v1318
        %v1320 = vpop.f32.mrf.mxu0
        %v1321 = vadd.f32 %v778, %v1320
        %v1322 = vpop.f32.mrf.mxu0
        %v1323 = vadd.f32 %v778, %v1322
        %1324 = vmatprep.mubr.bf16.mxu0 0
        %1325 = vmatmul.mubr.bf16.gmra.mxu0 %v976
        %v1326 = vpop.f32.mrf.mxu0
        %v1327 = vadd.f32 %v783, %v1326
        %v1328 = vpop.f32.mrf.mxu0
        %v1329 = vadd.f32 %v783, %v1328
        %v1330 = vpop.f32.mrf.mxu0
        %v1331 = vadd.f32 %v788, %v1330
        %v1332 = vpop.f32.mrf.mxu0
        %v1333 = vadd.f32 %v788, %v1332
        %1334 = vmatprep.mubr.bf16.mxu0 0
        %1335 = vmatmul.mubr.bf16.gmra.mxu0 %v977
        %v1336 = vpop.f32.mrf.mxu0
        %v1337 = vadd.f32 %v793, %v1336
        %v1338 = vpop.f32.mrf.mxu0
        %v1339 = vadd.f32 %v793, %v1338
        %v1340 = vpop.f32.mrf.mxu0
        %v1341 = vadd.f32 %v798, %v1340
        %v1342 = vpop.f32.mrf.mxu0
        %v1343 = vadd.f32 %v798, %v1342
        %1344 = vmatprep.mubr.bf16.mxu0 0
        %1345 = vmatmul.mubr.bf16.gmra.mxu0 %v978
        %v1346 = vpop.f32.mrf.mxu0
        %v1347 = vadd.f32 %v803, %v1346
        %v1348 = vpop.f32.mrf.mxu0
        %v1349 = vadd.f32 %v803, %v1348
        %v1350 = vpop.f32.mrf.mxu0
        %v1351 = vadd.f32 %v808, %v1350
        %v1352 = vpop.f32.mrf.mxu0
        %v1353 = vadd.f32 %v808, %v1352
        %1354 = vmatprep.mubr.bf16.mxu0 0
        %1355 = vmatmul.mubr.bf16.gmra.mxu0 %v979
        %v1356 = vpop.f32.mrf.mxu0
        %v1357 = vadd.f32 %v813, %v1356
        %v1358 = vpop.f32.mrf.mxu0
        %v1359 = vadd.f32 %v813, %v1358
        %v1360 = vpop.f32.mrf.mxu0
        %v1361 = vadd.f32 %v818, %v1360
        %v1362 = vpop.f32.mrf.mxu0
        %v1363 = vadd.f32 %v818, %v1362
        %1364 = vdwg.mxu0
        %v1365 = vmax.f32 %v1047, 0.0
        %v1366 = vmax.f32 %v1049, 0.0
        %v1367 = vmax.f32 %v1051, 0.0
        %v1368 = vmax.f32 %v1053, 0.0
        %v1369 = vmax.f32 %v1057, 0.0
        %v1370 = vmax.f32 %v1059, 0.0
        %v1371 = vmax.f32 %v1061, 0.0
        %v1372 = vmax.f32 %v1063, 0.0
        %v1373 = vmax.f32 %v1067, 0.0
        %v1374 = vmax.f32 %v1069, 0.0
        %v1375 = vmax.f32 %v1071, 0.0
        %v1376 = vmax.f32 %v1073, 0.0
        %v1377 = vmax.f32 %v1077, 0.0
        %v1378 = vmax.f32 %v1079, 0.0
        %v1379 = vmax.f32 %v1081, 0.0
        %v1380 = vmax.f32 %v1083, 0.0
        %v1381 = vmax.f32 %v1087, 0.0
        %v1382 = vmax.f32 %v1089, 0.0
        %v1383 = vmax.f32 %v1091, 0.0
        %v1384 = vmax.f32 %v1093, 0.0
        %v1385 = vmax.f32 %v1097, 0.0
        %v1386 = vmax.f32 %v1099, 0.0
        %v1387 = vmax.f32 %v1101, 0.0
        %v1388 = vmax.f32 %v1103, 0.0
        %v1389 = vmax.f32 %v1107, 0.0
        %v1390 = vmax.f32 %v1109, 0.0
        %v1391 = vmax.f32 %v1111, 0.0
        %v1392 = vmax.f32 %v1113, 0.0
        %v1393 = vmax.f32 %v1117, 0.0
        %v1394 = vmax.f32 %v1119, 0.0
        %v1395 = vmax.f32 %v1121, 0.0
        %v1396 = vmax.f32 %v1123, 0.0
        %v1397 = vmax.f32 %v1127, 0.0
        %v1398 = vmax.f32 %v1129, 0.0
        %v1399 = vmax.f32 %v1131, 0.0
        %v1400 = vmax.f32 %v1133, 0.0
        %v1401 = vmax.f32 %v1137, 0.0
        %v1402 = vmax.f32 %v1139, 0.0
        %v1403 = vmax.f32 %v1141, 0.0
        %v1404 = vmax.f32 %v1143, 0.0
        %v1405 = vmax.f32 %v1147, 0.0
        %v1406 = vmax.f32 %v1149, 0.0
        %v1407 = vmax.f32 %v1151, 0.0
        %v1408 = vmax.f32 %v1153, 0.0
        %v1409 = vmax.f32 %v1157, 0.0
        %v1410 = vmax.f32 %v1159, 0.0
        %v1411 = vmax.f32 %v1161, 0.0
        %v1412 = vmax.f32 %v1163, 0.0
        %v1413 = vmax.f32 %v1167, 0.0
        %v1414 = vmax.f32 %v1169, 0.0
        %v1415 = vmax.f32 %v1171, 0.0
        %v1416 = vmax.f32 %v1173, 0.0
        %v1417 = vmax.f32 %v1177, 0.0
        %v1418 = vmax.f32 %v1179, 0.0
        %v1419 = vmax.f32 %v1181, 0.0
        %v1420 = vmax.f32 %v1183, 0.0
        %v1421 = vmax.f32 %v1187, 0.0
        %v1422 = vmax.f32 %v1189, 0.0
        %v1423 = vmax.f32 %v1191, 0.0
        %v1424 = vmax.f32 %v1193, 0.0
        %v1425 = vmax.f32 %v1197, 0.0
        %v1426 = vmax.f32 %v1199, 0.0
        %v1427 = vmax.f32 %v1201, 0.0
        %v1428 = vmax.f32 %v1203, 0.0
        %v1429 = vmax.f32 %v1207, 0.0
        %v1430 = vmax.f32 %v1209, 0.0
        %v1431 = vmax.f32 %v1211, 0.0
        %v1432 = vmax.f32 %v1213, 0.0
        %v1433 = vmax.f32 %v1217, 0.0
        %v1434 = vmax.f32 %v1219, 0.0
        %v1435 = vmax.f32 %v1221, 0.0
        %v1436 = vmax.f32 %v1223, 0.0
        %v1437 = vmax.f32 %v1227, 0.0
        %v1438 = vmax.f32 %v1229, 0.0
        %v1439 = vmax.f32 %v1231, 0.0
        %v1440 = vmax.f32 %v1233, 0.0
        %v1441 = vmax.f32 %v1237, 0.0
        %v1442 = vmax.f32 %v1239, 0.0
        %v1443 = vmax.f32 %v1241, 0.0
        %v1444 = vmax.f32 %v1243, 0.0
        %v1445 = vmax.f32 %v1247, 0.0
        %v1446 = vmax.f32 %v1249, 0.0
        %v1447 = vmax.f32 %v1251, 0.0
        %v1448 = vmax.f32 %v1253, 0.0
        %v1449 = vmax.f32 %v1257, 0.0
        %v1450 = vmax.f32 %v1259, 0.0
        %v1451 = vmax.f32 %v1261, 0.0
        %v1452 = vmax.f32 %v1263, 0.0
        %v1453 = vmax.f32 %v1267, 0.0
        %v1454 = vmax.f32 %v1269, 0.0
        %v1455 = vmax.f32 %v1271, 0.0
        %v1456 = vmax.f32 %v1273, 0.0
        %v1457 = vmax.f32 %v1277, 0.0
        %v1458 = vmax.f32 %v1279, 0.0
        %v1459 = vmax.f32 %v1281, 0.0
        %v1460 = vmax.f32 %v1283, 0.0
        %v1461 = vmax.f32 %v1287, 0.0
        %v1462 = vmax.f32 %v1289, 0.0
        %v1463 = vmax.f32 %v1291, 0.0
        %v1464 = vmax.f32 %v1293, 0.0
        %v1465 = vmax.f32 %v1297, 0.0
        %v1466 = vmax.f32 %v1299, 0.0
        %v1467 = vmax.f32 %v1301, 0.0
        %v1468 = vmax.f32 %v1303, 0.0
        %v1469 = vmax.f32 %v1307, 0.0
        %v1470 = vmax.f32 %v1309, 0.0
        %v1471 = vmax.f32 %v1311, 0.0
        %v1472 = vmax.f32 %v1313, 0.0
        %v1473 = vmax.f32 %v1317, 0.0
        %v1474 = vmax.f32 %v1319, 0.0
        %v1475 = vmax.f32 %v1321, 0.0
        %v1476 = vmax.f32 %v1323, 0.0
        %v1477 = vmax.f32 %v1327, 0.0
        %v1478 = vmax.f32 %v1329, 0.0
        %v1479 = vmax.f32 %v1331, 0.0
        %v1480 = vmax.f32 %v1333, 0.0
        %v1481 = vmax.f32 %v1337, 0.0
        %v1482 = vmax.f32 %v1339, 0.0
        %v1483 = vmax.f32 %v1341, 0.0
        %v1484 = vmax.f32 %v1343, 0.0
        %v1485 = vmax.f32 %v1347, 0.0
        %v1486 = vmax.f32 %v1349, 0.0
        %v1487 = vmax.f32 %v1351, 0.0
        %v1488 = vmax.f32 %v1353, 0.0
        %v1489 = vmax.f32 %v1357, 0.0
        %v1490 = vmax.f32 %v1359, 0.0
        %v1491 = vmax.f32 %v1361, 0.0
        %v1492 = vmax.f32 %v1363, 0.0
        %v1493 = vld [vmem:[#allocation2] sm:$0xff]
        %v1494 = vld [vmem:[#allocation2 + $0x8] sm:$0xff]
        %v1495 = vld [vmem:[#allocation2 + $0x10] sm:$0xff]
        %v1496 = vld [vmem:[#allocation2 + $0x18] sm:$0xff]
        %v1497 = vld [vmem:[#allocation2 + $0x20] sm:$0xff]
        %v1498 = vld [vmem:[#allocation2 + $0x28] sm:$0xff]
        %v1499 = vld [vmem:[#allocation2 + $0x30] sm:$0xff]
        %v1500 = vld [vmem:[#allocation2 + $0x38] sm:$0xff]
        %v1501 = vld [vmem:[#allocation2 + $0x40] sm:$0xff]
        %v1502 = vld [vmem:[#allocation2 + $0x48] sm:$0xff]
        %v1503 = vld [vmem:[#allocation2 + $0x50] sm:$0xff]
        %v1504 = vld [vmem:[#allocation2 + $0x58] sm:$0xff]
        %v1505 = vld [vmem:[#allocation2 + $0x60] sm:$0xff]
        %v1506 = vld [vmem:[#allocation2 + $0x68] sm:$0xff]
        %v1507 = vld [vmem:[#allocation2 + $0x70] sm:$0xff]
        %v1508 = vld [vmem:[#allocation2 + $0x78] sm:$0xff]
        %v1509 = vld [vmem:[#allocation2 + $0x80] sm:$0xff]
        %v1510 = vld [vmem:[#allocation2 + $0x88] sm:$0xff]
        %v1511 = vld [vmem:[#allocation2 + $0x90] sm:$0xff]
        %v1512 = vld [vmem:[#allocation2 + $0x98] sm:$0xff]
        %v1513 = vld [vmem:[#allocation2 + $0xa0] sm:$0xff]
        %v1514 = vld [vmem:[#allocation2 + $0xa8] sm:$0xff]
        %v1515 = vld [vmem:[#allocation2 + $0xb0] sm:$0xff]
        %v1516 = vld [vmem:[#allocation2 + $0xb8] sm:$0xff]
        %v1517 = vld [vmem:[#allocation2 + $0xc0] sm:$0xff]
        %v1518 = vld [vmem:[#allocation2 + $0xc8] sm:$0xff]
        %v1519 = vld [vmem:[#allocation2 + $0xd0] sm:$0xff]
        %v1520 = vld [vmem:[#allocation2 + $0xd8] sm:$0xff]
        %v1521 = vld [vmem:[#allocation2 + $0xe0] sm:$0xff]
        %v1522 = vld [vmem:[#allocation2 + $0xe8] sm:$0xff]
        %v1523 = vld [vmem:[#allocation2 + $0xf0] sm:$0xff]
        %v1524 = vld [vmem:[#allocation2 + $0xf8] sm:$0xff]
        %v1525 = vld [vmem:[#allocation2 + $0x100] sm:$0xff]
        %v1526 = vld [vmem:[#allocation2 + $0x108] sm:$0xff]
        %v1527 = vld [vmem:[#allocation2 + $0x110] sm:$0xff]
        %v1528 = vld [vmem:[#allocation2 + $0x118] sm:$0xff]
        %v1529 = vld [vmem:[#allocation2 + $0x120] sm:$0xff]
        %v1530 = vld [vmem:[#allocation2 + $0x128] sm:$0xff]
        %v1531 = vld [vmem:[#allocation2 + $0x130] sm:$0xff]
        %v1532 = vld [vmem:[#allocation2 + $0x138] sm:$0xff]
        %v1533 = vld [vmem:[#allocation2 + $0x140] sm:$0xff]
        %v1534 = vld [vmem:[#allocation2 + $0x148] sm:$0xff]
        %v1535 = vld [vmem:[#allocation2 + $0x150] sm:$0xff]
        %v1536 = vld [vmem:[#allocation2 + $0x158] sm:$0xff]
        %v1537 = vld [vmem:[#allocation2 + $0x160] sm:$0xff]
        %v1538 = vld [vmem:[#allocation2 + $0x168] sm:$0xff]
        %v1539 = vld [vmem:[#allocation2 + $0x170] sm:$0xff]
        %v1540 = vld [vmem:[#allocation2 + $0x178] sm:$0xff]
        %v1541 = vld [vmem:[#allocation2 + $0x180] sm:$0xff]
        %v1542 = vld [vmem:[#allocation2 + $0x188] sm:$0xff]
        %v1543 = vld [vmem:[#allocation2 + $0x190] sm:$0xff]
        %v1544 = vld [vmem:[#allocation2 + $0x198] sm:$0xff]
        %v1545 = vld [vmem:[#allocation2 + $0x1a0] sm:$0xff]
        %v1546 = vld [vmem:[#allocation2 + $0x1a8] sm:$0xff]
        %v1547 = vld [vmem:[#allocation2 + $0x1b0] sm:$0xff]
        %v1548 = vld [vmem:[#allocation2 + $0x1b8] sm:$0xff]
        %v1549 = vld [vmem:[#allocation2 + $0x1c0] sm:$0xff]
        %v1550 = vld [vmem:[#allocation2 + $0x1c8] sm:$0xff]
        %v1551 = vld [vmem:[#allocation2 + $0x1d0] sm:$0xff]
        %v1552 = vld [vmem:[#allocation2 + $0x1d8] sm:$0xff]
        %v1553 = vld [vmem:[#allocation2 + $0x1e0] sm:$0xff]
        %v1554 = vld [vmem:[#allocation2 + $0x1e8] sm:$0xff]
        %v1555 = vld [vmem:[#allocation2 + $0x1f0] sm:$0xff]
        %v1556 = vld [vmem:[#allocation2 + $0x1f8] sm:$0xff]
        %v1557 = vpack.c.bf16 %v1367, %v1365
        %v1558 = vpack.c.bf16 %v1368, %v1366
        %v1559 = vpack.c.bf16 %v1371, %v1369
        %v1560 = vpack.c.bf16 %v1372, %v1370
        %v1561 = vpack.c.bf16 %v1375, %v1373
        %v1562 = vpack.c.bf16 %v1376, %v1374
        %v1563 = vpack.c.bf16 %v1379, %v1377
        %v1564 = vpack.c.bf16 %v1380, %v1378
        %v1565 = vpack.c.bf16 %v1383, %v1381
        %v1566 = vpack.c.bf16 %v1384, %v1382
        %v1567 = vpack.c.bf16 %v1387, %v1385
        %v1568 = vpack.c.bf16 %v1388, %v1386
        %v1569 = vpack.c.bf16 %v1391, %v1389
        %v1570 = vpack.c.bf16 %v1392, %v1390
        %v1571 = vpack.c.bf16 %v1395, %v1393
        %v1572 = vpack.c.bf16 %v1396, %v1394
        %v1573 = vpack.c.bf16 %v1399, %v1397
        %v1574 = vpack.c.bf16 %v1400, %v1398
        %v1575 = vpack.c.bf16 %v1403, %v1401
        %v1576 = vpack.c.bf16 %v1404, %v1402
        %v1577 = vpack.c.bf16 %v1407, %v1405
        %v1578 = vpack.c.bf16 %v1408, %v1406
        %v1579 = vpack.c.bf16 %v1411, %v1409
        %v1580 = vpack.c.bf16 %v1412, %v1410
        %v1581 = vpack.c.bf16 %v1415, %v1413
        %v1582 = vpack.c.bf16 %v1416, %v1414
        %v1583 = vpack.c.bf16 %v1419, %v1417
        %v1584 = vpack.c.bf16 %v1420, %v1418
        %v1585 = vpack.c.bf16 %v1423, %v1421
        %v1586 = vpack.c.bf16 %v1424, %v1422
        %v1587 = vpack.c.bf16 %v1427, %v1425
        %v1588 = vpack.c.bf16 %v1428, %v1426
        %v1589 = vpack.c.bf16 %v1431, %v1429
        %v1590 = vpack.c.bf16 %v1432, %v1430
        %v1591 = vpack.c.bf16 %v1435, %v1433
        %v1592 = vpack.c.bf16 %v1436, %v1434
        %v1593 = vpack.c.bf16 %v1439, %v1437
        %v1594 = vpack.c.bf16 %v1440, %v1438
        %v1595 = vpack.c.bf16 %v1443, %v1441
        %v1596 = vpack.c.bf16 %v1444, %v1442
        %v1597 = vpack.c.bf16 %v1447, %v1445
        %v1598 = vpack.c.bf16 %v1448, %v1446
        %v1599 = vpack.c.bf16 %v1451, %v1449
        %v1600 = vpack.c.bf16 %v1452, %v1450
        %v1601 = vpack.c.bf16 %v1455, %v1453
        %v1602 = vpack.c.bf16 %v1456, %v1454
        %v1603 = vpack.c.bf16 %v1459, %v1457
        %v1604 = vpack.c.bf16 %v1460, %v1458
        %v1605 = vpack.c.bf16 %v1463, %v1461
        %v1606 = vpack.c.bf16 %v1464, %v1462
        %v1607 = vpack.c.bf16 %v1467, %v1465
        %v1608 = vpack.c.bf16 %v1468, %v1466
        %v1609 = vpack.c.bf16 %v1471, %v1469
        %v1610 = vpack.c.bf16 %v1472, %v1470
        %v1611 = vpack.c.bf16 %v1475, %v1473
        %v1612 = vpack.c.bf16 %v1476, %v1474
        %v1613 = vpack.c.bf16 %v1479, %v1477
        %v1614 = vpack.c.bf16 %v1480, %v1478
        %v1615 = vpack.c.bf16 %v1483, %v1481
        %v1616 = vpack.c.bf16 %v1484, %v1482
        %v1617 = vpack.c.bf16 %v1487, %v1485
        %v1618 = vpack.c.bf16 %v1488, %v1486
        %v1619 = vpack.c.bf16 %v1491, %v1489
        %v1620 = vpack.c.bf16 %v1492, %v1490
        %v1621 = vld [vmem:[%s4] sm:$0xff]
        %v1622 = vld [vmem:[%s4 + $0x8] sm:$0xff]
        %v1623 = vld [vmem:[%s4 + $0x10] sm:$0xff]
        %v1624 = vld [vmem:[%s4 + $0x18] sm:$0xff]
        %v1625 = vld [vmem:[%s4 + $0x20] sm:$0xff]
        %v1626 = vld [vmem:[%s4 + $0x28] sm:$0xff]
        %v1627 = vld [vmem:[%s4 + $0x30] sm:$0xff]
        %v1628 = vld [vmem:[%s4 + $0x38] sm:$0xff]
        %v1629 = vld [vmem:[%s4 + $0x40] sm:$0xff]
        %v1630 = vld [vmem:[%s4 + $0x48] sm:$0xff]
        %v1631 = vld [vmem:[%s4 + $0x50] sm:$0xff]
        %v1632 = vld [vmem:[%s4 + $0x58] sm:$0xff]
        %v1633 = vld [vmem:[%s4 + $0x60] sm:$0xff]
        %v1634 = vld [vmem:[%s4 + $0x68] sm:$0xff]
        %v1635 = vld [vmem:[%s4 + $0x70] sm:$0xff]
        %v1636 = vld [vmem:[%s4 + $0x78] sm:$0xff]
        %v1637 = vld [vmem:[%s4 + $0x80] sm:$0xff]
        %v1638 = vld [vmem:[%s4 + $0x88] sm:$0xff]
        %v1639 = vld [vmem:[%s4 + $0x90] sm:$0xff]
        %v1640 = vld [vmem:[%s4 + $0x98] sm:$0xff]
        %v1641 = vld [vmem:[%s4 + $0xa0] sm:$0xff]
        %v1642 = vld [vmem:[%s4 + $0xa8] sm:$0xff]
        %v1643 = vld [vmem:[%s4 + $0xb0] sm:$0xff]
        %v1644 = vld [vmem:[%s4 + $0xb8] sm:$0xff]
        %v1645 = vld [vmem:[%s4 + $0xc0] sm:$0xff]
        %v1646 = vld [vmem:[%s4 + $0xc8] sm:$0xff]
        %v1647 = vld [vmem:[%s4 + $0xd0] sm:$0xff]
        %v1648 = vld [vmem:[%s4 + $0xd8] sm:$0xff]
        %v1649 = vld [vmem:[%s4 + $0xe0] sm:$0xff]
        %v1650 = vld [vmem:[%s4 + $0xe8] sm:$0xff]
        %v1651 = vld [vmem:[%s4 + $0xf0] sm:$0xff]
        %v1652 = vld [vmem:[%s4 + $0xf8] sm:$0xff]
        %1654 = vset.pattern.permute.xlu0 0
        %1655 = vperm.xlu0 %1654, %v1621
        %v1656 = vpop.permute.xlu0 %1655
        %1659 = vset.pattern.permute.xlu0 0
        %1660 = vperm.xlu0 %1659, %v1622
        %v1661 = vpop.permute.xlu0 %1660
        %1664 = vset.pattern.permute.xlu0 0
        %1665 = vperm.xlu0 %1664, %v1623
        %v1666 = vpop.permute.xlu0 %1665
        %1669 = vset.pattern.permute.xlu0 0
        %1670 = vperm.xlu0 %1669, %v1624
        %v1671 = vpop.permute.xlu0 %1670
        %1674 = vset.pattern.permute.xlu0 0
        %1675 = vperm.xlu0 %1674, %v1625
        %v1676 = vpop.permute.xlu0 %1675
        %1679 = vset.pattern.permute.xlu0 0
        %1680 = vperm.xlu0 %1679, %v1626
        %v1681 = vpop.permute.xlu0 %1680
        %1684 = vset.pattern.permute.xlu0 0
        %1685 = vperm.xlu0 %1684, %v1627
        %v1686 = vpop.permute.xlu0 %1685
        %1689 = vset.pattern.permute.xlu0 0
        %1690 = vperm.xlu0 %1689, %v1628
        %v1691 = vpop.permute.xlu0 %1690
        %1694 = vset.pattern.permute.xlu0 0
        %1695 = vperm.xlu0 %1694, %v1629
        %v1696 = vpop.permute.xlu0 %1695
        %1699 = vset.pattern.permute.xlu0 0
        %1700 = vperm.xlu0 %1699, %v1630
        %v1701 = vpop.permute.xlu0 %1700
        %1704 = vset.pattern.permute.xlu0 0
        %1705 = vperm.xlu0 %1704, %v1631
        %v1706 = vpop.permute.xlu0 %1705
        %1709 = vset.pattern.permute.xlu0 0
        %1710 = vperm.xlu0 %1709, %v1632
        %v1711 = vpop.permute.xlu0 %1710
        %1714 = vset.pattern.permute.xlu0 0
        %1715 = vperm.xlu0 %1714, %v1633
        %v1716 = vpop.permute.xlu0 %1715
        %1719 = vset.pattern.permute.xlu0 0
        %1720 = vperm.xlu0 %1719, %v1634
        %v1721 = vpop.permute.xlu0 %1720
        %1724 = vset.pattern.permute.xlu0 0
        %1725 = vperm.xlu0 %1724, %v1635
        %v1726 = vpop.permute.xlu0 %1725
        %1729 = vset.pattern.permute.xlu0 0
        %1730 = vperm.xlu0 %1729, %v1636
        %v1731 = vpop.permute.xlu0 %1730
        %1734 = vset.pattern.permute.xlu0 0
        %1735 = vperm.xlu0 %1734, %v1637
        %v1736 = vpop.permute.xlu0 %1735
        %1739 = vset.pattern.permute.xlu0 0
        %1740 = vperm.xlu0 %1739, %v1638
        %v1741 = vpop.permute.xlu0 %1740
        %1744 = vset.pattern.permute.xlu0 0
        %1745 = vperm.xlu0 %1744, %v1639
        %v1746 = vpop.permute.xlu0 %1745
        %1749 = vset.pattern.permute.xlu0 0
        %1750 = vperm.xlu0 %1749, %v1640
        %v1751 = vpop.permute.xlu0 %1750
        %1754 = vset.pattern.permute.xlu0 0
        %1755 = vperm.xlu0 %1754, %v1641
        %v1756 = vpop.permute.xlu0 %1755
        %1759 = vset.pattern.permute.xlu0 0
        %1760 = vperm.xlu0 %1759, %v1642
        %v1761 = vpop.permute.xlu0 %1760
        %1764 = vset.pattern.permute.xlu0 0
        %1765 = vperm.xlu0 %1764, %v1643
        %v1766 = vpop.permute.xlu0 %1765
        %1769 = vset.pattern.permute.xlu0 0
        %1770 = vperm.xlu0 %1769, %v1644
        %v1771 = vpop.permute.xlu0 %1770
        %1774 = vset.pattern.permute.xlu0 0
        %1775 = vperm.xlu0 %1774, %v1645
        %v1776 = vpop.permute.xlu0 %1775
        %1779 = vset.pattern.permute.xlu0 0
        %1780 = vperm.xlu0 %1779, %v1646
        %v1781 = vpop.permute.xlu0 %1780
        %1784 = vset.pattern.permute.xlu0 0
        %1785 = vperm.xlu0 %1784, %v1647
        %v1786 = vpop.permute.xlu0 %1785
        %1789 = vset.pattern.permute.xlu0 0
        %1790 = vperm.xlu0 %1789, %v1648
        %v1791 = vpop.permute.xlu0 %1790
        %1794 = vset.pattern.permute.xlu0 0
        %1795 = vperm.xlu0 %1794, %v1649
        %v1796 = vpop.permute.xlu0 %1795
        %1799 = vset.pattern.permute.xlu0 0
        %1800 = vperm.xlu0 %1799, %v1650
        %v1801 = vpop.permute.xlu0 %1800
        %1804 = vset.pattern.permute.xlu0 0
        %1805 = vperm.xlu0 %1804, %v1651
        %v1806 = vpop.permute.xlu0 %1805
        %1809 = vset.pattern.permute.xlu0 0
        %1810 = vperm.xlu0 %1809, %v1652
        %v1811 = vpop.permute.xlu0 %1810
        %v1877 = vunpack.c.l.b16 %v1493
        %v1878 = vunpack.c.h.b16 %v1493
        %v1879 = vunpack.c.l.b16 %v1494
        %v1880 = vunpack.c.h.b16 %v1494
        %v1881 = vunpack.c.l.b16 %v1495
        %v1882 = vunpack.c.h.b16 %v1495
        %v1883 = vunpack.c.l.b16 %v1496
        %v1884 = vunpack.c.h.b16 %v1496
        %v1885 = vunpack.c.l.b16 %v1497
        %v1886 = vunpack.c.h.b16 %v1497
        %v1887 = vunpack.c.l.b16 %v1498
        %v1888 = vunpack.c.h.b16 %v1498
        %v1889 = vunpack.c.l.b16 %v1499
        %v1890 = vunpack.c.h.b16 %v1499
        %v1891 = vunpack.c.l.b16 %v1500
        %v1892 = vunpack.c.h.b16 %v1500
        %v1893 = vunpack.c.l.b16 %v1501
        %v1894 = vunpack.c.h.b16 %v1501
        %v1895 = vunpack.c.l.b16 %v1502
        %v1896 = vunpack.c.h.b16 %v1502
        %v1897 = vunpack.c.l.b16 %v1503
        %v1898 = vunpack.c.h.b16 %v1503
        %v1899 = vunpack.c.l.b16 %v1504
        %v1900 = vunpack.c.h.b16 %v1504
        %v1901 = vunpack.c.l.b16 %v1505
        %v1902 = vunpack.c.h.b16 %v1505
        %v1903 = vunpack.c.l.b16 %v1506
        %v1904 = vunpack.c.h.b16 %v1506
        %v1905 = vunpack.c.l.b16 %v1507
        %v1906 = vunpack.c.h.b16 %v1507
        %v1907 = vunpack.c.l.b16 %v1508
        %v1908 = vunpack.c.h.b16 %v1508
        %v1909 = vunpack.c.l.b16 %v1509
        %v1910 = vunpack.c.h.b16 %v1509
        %v1911 = vunpack.c.l.b16 %v1510
        %v1912 = vunpack.c.h.b16 %v1510
        %v1913 = vunpack.c.l.b16 %v1511
        %v1914 = vunpack.c.h.b16 %v1511
        %v1915 = vunpack.c.l.b16 %v1512
        %v1916 = vunpack.c.h.b16 %v1512
        %v1917 = vunpack.c.l.b16 %v1513
        %v1918 = vunpack.c.h.b16 %v1513
        %v1919 = vunpack.c.l.b16 %v1514
        %v1920 = vunpack.c.h.b16 %v1514
        %v1921 = vunpack.c.l.b16 %v1515
        %v1922 = vunpack.c.h.b16 %v1515
        %v1923 = vunpack.c.l.b16 %v1516
        %v1924 = vunpack.c.h.b16 %v1516
        %v1925 = vunpack.c.l.b16 %v1517
        %v1926 = vunpack.c.h.b16 %v1517
        %v1927 = vunpack.c.l.b16 %v1518
        %v1928 = vunpack.c.h.b16 %v1518
        %v1929 = vunpack.c.l.b16 %v1519
        %v1930 = vunpack.c.h.b16 %v1519
        %v1931 = vunpack.c.l.b16 %v1520
        %v1932 = vunpack.c.h.b16 %v1520
        %v1933 = vunpack.c.l.b16 %v1521
        %v1934 = vunpack.c.h.b16 %v1521
        %v1935 = vunpack.c.l.b16 %v1522
        %v1936 = vunpack.c.h.b16 %v1522
        %v1937 = vunpack.c.l.b16 %v1523
        %v1938 = vunpack.c.h.b16 %v1523
        %v1939 = vunpack.c.l.b16 %v1524
        %v1940 = vunpack.c.h.b16 %v1524
        %v1941 = vunpack.c.l.b16 %v1525
        %v1942 = vunpack.c.h.b16 %v1525
        %v1943 = vunpack.c.l.b16 %v1526
        %v1944 = vunpack.c.h.b16 %v1526
        %v1945 = vunpack.c.l.b16 %v1527
        %v1946 = vunpack.c.h.b16 %v1527
        %v1947 = vunpack.c.l.b16 %v1528
        %v1948 = vunpack.c.h.b16 %v1528
        %v1949 = vunpack.c.l.b16 %v1529
        %v1950 = vunpack.c.h.b16 %v1529
        %v1951 = vunpack.c.l.b16 %v1530
        %v1952 = vunpack.c.h.b16 %v1530
        %v1953 = vunpack.c.l.b16 %v1531
        %v1954 = vunpack.c.h.b16 %v1531
        %v1955 = vunpack.c.l.b16 %v1532
        %v1956 = vunpack.c.h.b16 %v1532
        %v1957 = vunpack.c.l.b16 %v1533
        %v1958 = vunpack.c.h.b16 %v1533
        %v1959 = vunpack.c.l.b16 %v1534
        %v1960 = vunpack.c.h.b16 %v1534
        %v1961 = vunpack.c.l.b16 %v1535
        %v1962 = vunpack.c.h.b16 %v1535
        %v1963 = vunpack.c.l.b16 %v1536
        %v1964 = vunpack.c.h.b16 %v1536
        %v1965 = vunpack.c.l.b16 %v1537
        %v1966 = vunpack.c.h.b16 %v1537
        %v1967 = vunpack.c.l.b16 %v1538
        %v1968 = vunpack.c.h.b16 %v1538
        %v1969 = vunpack.c.l.b16 %v1539
        %v1970 = vunpack.c.h.b16 %v1539
        %v1971 = vunpack.c.l.b16 %v1540
        %v1972 = vunpack.c.h.b16 %v1540
        %v1973 = vunpack.c.l.b16 %v1541
        %v1974 = vunpack.c.h.b16 %v1541
        %v1975 = vunpack.c.l.b16 %v1542
        %v1976 = vunpack.c.h.b16 %v1542
        %v1977 = vunpack.c.l.b16 %v1543
        %v1978 = vunpack.c.h.b16 %v1543
        %v1979 = vunpack.c.l.b16 %v1544
        %v1980 = vunpack.c.h.b16 %v1544
        %v1981 = vunpack.c.l.b16 %v1545
        %v1982 = vunpack.c.h.b16 %v1545
        %v1983 = vunpack.c.l.b16 %v1546
        %v1984 = vunpack.c.h.b16 %v1546
        %v1985 = vunpack.c.l.b16 %v1547
        %v1986 = vunpack.c.h.b16 %v1547
        %v1987 = vunpack.c.l.b16 %v1548
        %v1988 = vunpack.c.h.b16 %v1548
        %v1989 = vunpack.c.l.b16 %v1549
        %v1990 = vunpack.c.h.b16 %v1549
        %v1991 = vunpack.c.l.b16 %v1550
        %v1992 = vunpack.c.h.b16 %v1550
        %v1993 = vunpack.c.l.b16 %v1551
        %v1994 = vunpack.c.h.b16 %v1551
        %v1995 = vunpack.c.l.b16 %v1552
        %v1996 = vunpack.c.h.b16 %v1552
        %v1997 = vunpack.c.l.b16 %v1553
        %v1998 = vunpack.c.h.b16 %v1553
        %v1999 = vunpack.c.l.b16 %v1554
        %v2000 = vunpack.c.h.b16 %v1554
        %v2001 = vunpack.c.l.b16 %v1555
        %v2002 = vunpack.c.h.b16 %v1555
        %v2003 = vunpack.c.l.b16 %v1556
        %v2004 = vunpack.c.h.b16 %v1556
        %v2005 = vpack.c.b16 %v1881, %v1877
        %v2006 = vpack.c.b16 %v1882, %v1878
        %v2007 = vpack.c.b16 %v1883, %v1879
        %v2008 = vpack.c.b16 %v1884, %v1880
        %v2009 = vpack.c.b16 %v1889, %v1885
        %v2010 = vpack.c.b16 %v1890, %v1886
        %v2011 = vpack.c.b16 %v1891, %v1887
        %v2012 = vpack.c.b16 %v1892, %v1888
        %v2013 = vpack.c.b16 %v1897, %v1893
        %v2014 = vpack.c.b16 %v1898, %v1894
        %v2015 = vpack.c.b16 %v1899, %v1895
        %v2016 = vpack.c.b16 %v1900, %v1896
        %v2017 = vpack.c.b16 %v1905, %v1901
        %v2018 = vpack.c.b16 %v1906, %v1902
        %v2019 = vpack.c.b16 %v1907, %v1903
        %v2020 = vpack.c.b16 %v1908, %v1904
        %v2021 = vpack.c.b16 %v1913, %v1909
        %v2022 = vpack.c.b16 %v1914, %v1910
        %v2023 = vpack.c.b16 %v1915, %v1911
        %v2024 = vpack.c.b16 %v1916, %v1912
        %v2025 = vpack.c.b16 %v1921, %v1917
        %v2026 = vpack.c.b16 %v1922, %v1918
        %v2027 = vpack.c.b16 %v1923, %v1919
        %v2028 = vpack.c.b16 %v1924, %v1920
        %v2029 = vpack.c.b16 %v1929, %v1925
        %v2030 = vpack.c.b16 %v1930, %v1926
        %v2031 = vpack.c.b16 %v1931, %v1927
        %v2032 = vpack.c.b16 %v1932, %v1928
        %v2033 = vpack.c.b16 %v1937, %v1933
        %v2034 = vpack.c.b16 %v1938, %v1934
        %v2035 = vpack.c.b16 %v1939, %v1935
        %v2036 = vpack.c.b16 %v1940, %v1936
        %v2037 = vpack.c.b16 %v1945, %v1941
        %v2038 = vpack.c.b16 %v1946, %v1942
        %v2039 = vpack.c.b16 %v1947, %v1943
        %v2040 = vpack.c.b16 %v1948, %v1944
        %v2041 = vpack.c.b16 %v1953, %v1949
        %v2042 = vpack.c.b16 %v1954, %v1950
        %v2043 = vpack.c.b16 %v1955, %v1951
        %v2044 = vpack.c.b16 %v1956, %v1952
        %v2045 = vpack.c.b16 %v1961, %v1957
        %v2046 = vpack.c.b16 %v1962, %v1958
        %v2047 = vpack.c.b16 %v1963, %v1959
        %v2048 = vpack.c.b16 %v1964, %v1960
        %v2049 = vpack.c.b16 %v1969, %v1965
        %v2050 = vpack.c.b16 %v1970, %v1966
        %v2051 = vpack.c.b16 %v1971, %v1967
        %v2052 = vpack.c.b16 %v1972, %v1968
        %v2053 = vpack.c.b16 %v1977, %v1973
        %v2054 = vpack.c.b16 %v1978, %v1974
        %v2055 = vpack.c.b16 %v1979, %v1975
        %v2056 = vpack.c.b16 %v1980, %v1976
        %v2057 = vpack.c.b16 %v1985, %v1981
        %v2058 = vpack.c.b16 %v1986, %v1982
        %v2059 = vpack.c.b16 %v1987, %v1983
        %v2060 = vpack.c.b16 %v1988, %v1984
        %v2061 = vpack.c.b16 %v1993, %v1989
        %v2062 = vpack.c.b16 %v1994, %v1990
        %v2063 = vpack.c.b16 %v1995, %v1991
        %v2064 = vpack.c.b16 %v1996, %v1992
        %v2065 = vpack.c.b16 %v2001, %v1997
        %v2066 = vpack.c.b16 %v2002, %v1998
        %v2067 = vpack.c.b16 %v2003, %v1999
        %v2068 = vpack.c.b16 %v2004, %v2000
        %2133 = vmatprep.subr.bf16.mxu0 %v1572
        %2134 = vmatpush1.bf16.msra.mxu0 %v1571
        %2135 = vmatprep.subr.bf16.mxu0 %v1570
        %2136 = vmatpush1.bf16.msra.mxu0 %v1569
        %2137 = vmatprep.subr.bf16.mxu0 %v1568
        %2138 = vmatpush1.bf16.msra.mxu0 %v1567
        %2139 = vmatprep.subr.bf16.mxu0 %v1566
        %2140 = vmatpush1.bf16.msra.mxu0 %v1565
        %2141 = vmatprep.subr.bf16.mxu0 %v1564
        %2142 = vmatpush1.bf16.msra.mxu0 %v1563
        %2143 = vmatprep.subr.bf16.mxu0 %v1562
        %2144 = vmatpush1.bf16.msra.mxu0 %v1561
        %2145 = vmatprep.subr.bf16.mxu0 %v1560
        %2146 = vmatpush1.bf16.msra.mxu0 %v1559
        %2147 = vmatprep.subr.bf16.mxu0 %v1558
        %2148 = vmatpush1.bf16.msra.mxu0 %v1557
        %2149 = vmatprep.subr.bf16.mxu0 %v1588
        %2150 = vmatpush2.bf16.msra.mxu0 %v1587
        %2151 = vmatprep.subr.bf16.mxu0 %v1586
        %2152 = vmatpush2.bf16.msra.mxu0 %v1585
        %2153 = vmatprep.subr.bf16.mxu0 %v1584
        %2154 = vmatpush2.bf16.msra.mxu0 %v1583
        %2155 = vmatprep.subr.bf16.mxu0 %v1582
        %2156 = vmatpush2.bf16.msra.mxu0 %v1581
        %2157 = vmatprep.subr.bf16.mxu0 %v1580
        %2158 = vmatpush2.bf16.msra.mxu0 %v1579
        %2159 = vmatprep.subr.bf16.mxu0 %v1578
        %2160 = vmatpush2.bf16.msra.mxu0 %v1577
        %2161 = vmatprep.subr.bf16.mxu0 %v1576
        %2162 = vmatpush2.bf16.msra.mxu0 %v1575
        %2163 = vmatprep.subr.bf16.mxu0 %v1574
        %2164 = vmatpush2.bf16.msra.mxu0 %v1573
        %2165 = vmatprep.mubr.bf16.mxu0 %v2006
        %2166 = vmatmul.mubr.bf16.gmra.mxu0 %v2005
        %v2167 = vpop.f32.mrf.mxu0
        %v2168 = vadd.f32 %v1656, %v2167
        %v2169 = vpop.f32.mrf.mxu0
        %v2170 = vadd.f32 %v1656, %v2169
        %v2171 = vpop.f32.mrf.mxu0
        %v2172 = vadd.f32 %v1661, %v2171
        %v2173 = vpop.f32.mrf.mxu0
        %v2174 = vadd.f32 %v1661, %v2173
        %2175 = vmatprep.mubr.bf16.mxu0 %v2010
        %2176 = vmatmul.mubr.bf16.gmra.mxu0 %v2009
        %v2177 = vpop.f32.mrf.mxu0
        %v2178 = vadd.f32 %v1666, %v2177
        %v2179 = vpop.f32.mrf.mxu0
        %v2180 = vadd.f32 %v1666, %v2179
        %v2181 = vpop.f32.mrf.mxu0
        %v2182 = vadd.f32 %v1671, %v2181
        %v2183 = vpop.f32.mrf.mxu0
        %v2184 = vadd.f32 %v1671, %v2183
        %2185 = vmatprep.mubr.bf16.mxu0 %v2014
        %2186 = vmatmul.mubr.bf16.gmra.mxu0 %v2013
        %v2187 = vpop.f32.mrf.mxu0
        %v2188 = vadd.f32 %v1676, %v2187
        %v2189 = vpop.f32.mrf.mxu0
        %v2190 = vadd.f32 %v1676, %v2189
        %v2191 = vpop.f32.mrf.mxu0
        %v2192 = vadd.f32 %v1681, %v2191
        %v2193 = vpop.f32.mrf.mxu0
        %v2194 = vadd.f32 %v1681, %v2193
        %2195 = vmatprep.mubr.bf16.mxu0 %v2018
        %2196 = vmatmul.mubr.bf16.gmra.mxu0 %v2017
        %v2197 = vpop.f32.mrf.mxu0
        %v2198 = vadd.f32 %v1686, %v2197
        %v2199 = vpop.f32.mrf.mxu0
        %v2200 = vadd.f32 %v1686, %v2199
        %v2201 = vpop.f32.mrf.mxu0
        %v2202 = vadd.f32 %v1691, %v2201
        %v2203 = vpop.f32.mrf.mxu0
        %v2204 = vadd.f32 %v1691, %v2203
        %2205 = vmatprep.mubr.bf16.mxu0 %v2022
        %2206 = vmatmul.mubr.bf16.gmra.mxu0 %v2021
        %v2207 = vpop.f32.mrf.mxu0
        %v2208 = vadd.f32 %v1696, %v2207
        %v2209 = vpop.f32.mrf.mxu0
        %v2210 = vadd.f32 %v1696, %v2209
        %v2211 = vpop.f32.mrf.mxu0
        %v2212 = vadd.f32 %v1701, %v2211
        %v2213 = vpop.f32.mrf.mxu0
        %v2214 = vadd.f32 %v1701, %v2213
        %2215 = vmatprep.mubr.bf16.mxu0 %v2026
        %2216 = vmatmul.mubr.bf16.gmra.mxu0 %v2025
        %v2217 = vpop.f32.mrf.mxu0
        %v2218 = vadd.f32 %v1706, %v2217
        %v2219 = vpop.f32.mrf.mxu0
        %v2220 = vadd.f32 %v1706, %v2219
        %v2221 = vpop.f32.mrf.mxu0
        %v2222 = vadd.f32 %v1711, %v2221
        %v2223 = vpop.f32.mrf.mxu0
        %v2224 = vadd.f32 %v1711, %v2223
        %2225 = vmatprep.mubr.bf16.mxu0 %v2030
        %2226 = vmatmul.mubr.bf16.gmra.mxu0 %v2029
        %v2227 = vpop.f32.mrf.mxu0
        %v2228 = vadd.f32 %v1716, %v2227
        %v2229 = vpop.f32.mrf.mxu0
        %v2230 = vadd.f32 %v1716, %v2229
        %v2231 = vpop.f32.mrf.mxu0
        %v2232 = vadd.f32 %v1721, %v2231
        %v2233 = vpop.f32.mrf.mxu0
        %v2234 = vadd.f32 %v1721, %v2233
        %2235 = vmatprep.mubr.bf16.mxu0 %v2034
        %2236 = vmatmul.mubr.bf16.gmra.mxu0 %v2033
        %v2237 = vpop.f32.mrf.mxu0
        %v2238 = vadd.f32 %v1726, %v2237
        %v2239 = vpop.f32.mrf.mxu0
        %v2240 = vadd.f32 %v1726, %v2239
        %v2241 = vpop.f32.mrf.mxu0
        %v2242 = vadd.f32 %v1731, %v2241
        %v2243 = vpop.f32.mrf.mxu0
        %v2244 = vadd.f32 %v1731, %v2243
        %2245 = vmatprep.mubr.bf16.mxu0 %v2038
        %2246 = vmatmul.mubr.bf16.gmra.mxu0 %v2037
        %v2247 = vpop.f32.mrf.mxu0
        %v2248 = vadd.f32 %v1736, %v2247
        %v2249 = vpop.f32.mrf.mxu0
        %v2250 = vadd.f32 %v1736, %v2249
        %v2251 = vpop.f32.mrf.mxu0
        %v2252 = vadd.f32 %v1741, %v2251
        %v2253 = vpop.f32.mrf.mxu0
        %v2254 = vadd.f32 %v1741, %v2253
        %2255 = vmatprep.mubr.bf16.mxu0 %v2042
        %2256 = vmatmul.mubr.bf16.gmra.mxu0 %v2041
        %v2257 = vpop.f32.mrf.mxu0
        %v2258 = vadd.f32 %v1746, %v2257
        %v2259 = vpop.f32.mrf.mxu0
        %v2260 = vadd.f32 %v1746, %v2259
        %v2261 = vpop.f32.mrf.mxu0
        %v2262 = vadd.f32 %v1751, %v2261
        %v2263 = vpop.f32.mrf.mxu0
        %v2264 = vadd.f32 %v1751, %v2263
        %2265 = vmatprep.mubr.bf16.mxu0 %v2046
        %2266 = vmatmul.mubr.bf16.gmra.mxu0 %v2045
        %v2267 = vpop.f32.mrf.mxu0
        %v2268 = vadd.f32 %v1756, %v2267
        %v2269 = vpop.f32.mrf.mxu0
        %v2270 = vadd.f32 %v1756, %v2269
        %v2271 = vpop.f32.mrf.mxu0
        %v2272 = vadd.f32 %v1761, %v2271
        %v2273 = vpop.f32.mrf.mxu0
        %v2274 = vadd.f32 %v1761, %v2273
        %2275 = vmatprep.mubr.bf16.mxu0 %v2050
        %2276 = vmatmul.mubr.bf16.gmra.mxu0 %v2049
        %v2277 = vpop.f32.mrf.mxu0
        %v2278 = vadd.f32 %v1766, %v2277
        %v2279 = vpop.f32.mrf.mxu0
        %v2280 = vadd.f32 %v1766, %v2279
        %v2281 = vpop.f32.mrf.mxu0
        %v2282 = vadd.f32 %v1771, %v2281
        %v2283 = vpop.f32.mrf.mxu0
        %v2284 = vadd.f32 %v1771, %v2283
        %2285 = vmatprep.mubr.bf16.mxu0 %v2054
        %2286 = vmatmul.mubr.bf16.gmra.mxu0 %v2053
        %v2287 = vpop.f32.mrf.mxu0
        %v2288 = vadd.f32 %v1776, %v2287
        %v2289 = vpop.f32.mrf.mxu0
        %v2290 = vadd.f32 %v1776, %v2289
        %v2291 = vpop.f32.mrf.mxu0
        %v2292 = vadd.f32 %v1781, %v2291
        %v2293 = vpop.f32.mrf.mxu0
        %v2294 = vadd.f32 %v1781, %v2293
        %2295 = vmatprep.mubr.bf16.mxu0 %v2058
        %2296 = vmatmul.mubr.bf16.gmra.mxu0 %v2057
        %v2297 = vpop.f32.mrf.mxu0
        %v2298 = vadd.f32 %v1786, %v2297
        %v2299 = vpop.f32.mrf.mxu0
        %v2300 = vadd.f32 %v1786, %v2299
        %v2301 = vpop.f32.mrf.mxu0
        %v2302 = vadd.f32 %v1791, %v2301
        %v2303 = vpop.f32.mrf.mxu0
        %v2304 = vadd.f32 %v1791, %v2303
        %2305 = vmatprep.mubr.bf16.mxu0 %v2062
        %2306 = vmatmul.mubr.bf16.gmra.mxu0 %v2061
        %v2307 = vpop.f32.mrf.mxu0
        %v2308 = vadd.f32 %v1796, %v2307
        %v2309 = vpop.f32.mrf.mxu0
        %v2310 = vadd.f32 %v1796, %v2309
        %v2311 = vpop.f32.mrf.mxu0
        %v2312 = vadd.f32 %v1801, %v2311
        %v2313 = vpop.f32.mrf.mxu0
        %v2314 = vadd.f32 %v1801, %v2313
        %2315 = vmatprep.mubr.bf16.mxu0 %v2066
        %2316 = vmatmul.mubr.bf16.gmra.mxu0 %v2065
        %v2317 = vpop.f32.mrf.mxu0
        %v2318 = vadd.f32 %v1806, %v2317
        %v2319 = vpop.f32.mrf.mxu0
        %v2320 = vadd.f32 %v1806, %v2319
        %v2321 = vpop.f32.mrf.mxu0
        %v2322 = vadd.f32 %v1811, %v2321
        %v2323 = vpop.f32.mrf.mxu0
        %v2324 = vadd.f32 %v1811, %v2323
        %2325 = vdwg.mxu0
        %2326 = vmatprep.subr.bf16.mxu0 %v1604
        %2327 = vmatpush1.bf16.msra.mxu0 %v1603
        %2328 = vmatprep.subr.bf16.mxu0 %v1602
        %2329 = vmatpush1.bf16.msra.mxu0 %v1601
        %2330 = vmatprep.subr.bf16.mxu0 %v1600
        %2331 = vmatpush1.bf16.msra.mxu0 %v1599
        %2332 = vmatprep.subr.bf16.mxu0 %v1598
        %2333 = vmatpush1.bf16.msra.mxu0 %v1597
        %2334 = vmatprep.subr.bf16.mxu0 %v1596
        %2335 = vmatpush1.bf16.msra.mxu0 %v1595
        %2336 = vmatprep.subr.bf16.mxu0 %v1594
        %2337 = vmatpush1.bf16.msra.mxu0 %v1593
        %2338 = vmatprep.subr.bf16.mxu0 %v1592
        %2339 = vmatpush1.bf16.msra.mxu0 %v1591
        %2340 = vmatprep.subr.bf16.mxu0 %v1590
        %2341 = vmatpush1.bf16.msra.mxu0 %v1589
        %2342 = vmatprep.subr.bf16.mxu0 %v1620
        %2343 = vmatpush2.bf16.msra.mxu0 %v1619
        %2344 = vmatprep.subr.bf16.mxu0 %v1618
        %2345 = vmatpush2.bf16.msra.mxu0 %v1617
        %2346 = vmatprep.subr.bf16.mxu0 %v1616
        %2347 = vmatpush2.bf16.msra.mxu0 %v1615
        %2348 = vmatprep.subr.bf16.mxu0 %v1614
        %2349 = vmatpush2.bf16.msra.mxu0 %v1613
        %2350 = vmatprep.subr.bf16.mxu0 %v1612
        %2351 = vmatpush2.bf16.msra.mxu0 %v1611
        %2352 = vmatprep.subr.bf16.mxu0 %v1610
        %2353 = vmatpush2.bf16.msra.mxu0 %v1609
        %2354 = vmatprep.subr.bf16.mxu0 %v1608
        %2355 = vmatpush2.bf16.msra.mxu0 %v1607
        %2356 = vmatprep.subr.bf16.mxu0 %v1606
        %2357 = vmatpush2.bf16.msra.mxu0 %v1605
        %2358 = vmatprep.mubr.bf16.mxu0 %v2008
        %2359 = vmatmul.mubr.bf16.gmra.mxu0 %v2007
        %v2360 = vpop.f32.mrf.mxu0
        %v2361 = vadd.f32 %v2168, %v2360
        %v2362 = vpop.f32.mrf.mxu0
        %v2363 = vadd.f32 %v2170, %v2362
        %v2364 = vpop.f32.mrf.mxu0
        %v2365 = vadd.f32 %v2172, %v2364
        %v2366 = vpop.f32.mrf.mxu0
        %v2367 = vadd.f32 %v2174, %v2366
        %2368 = vmatprep.mubr.bf16.mxu0 %v2012
        %2369 = vmatmul.mubr.bf16.gmra.mxu0 %v2011
        %v2370 = vpop.f32.mrf.mxu0
        %v2371 = vadd.f32 %v2178, %v2370
        %v2372 = vpop.f32.mrf.mxu0
        %v2373 = vadd.f32 %v2180, %v2372
        %v2374 = vpop.f32.mrf.mxu0
        %v2375 = vadd.f32 %v2182, %v2374
        %v2376 = vpop.f32.mrf.mxu0
        %v2377 = vadd.f32 %v2184, %v2376
        %2378 = vmatprep.mubr.bf16.mxu0 %v2016
        %2379 = vmatmul.mubr.bf16.gmra.mxu0 %v2015
        %v2380 = vpop.f32.mrf.mxu0
        %v2381 = vadd.f32 %v2188, %v2380
        %v2382 = vpop.f32.mrf.mxu0
        %v2383 = vadd.f32 %v2190, %v2382
        %v2384 = vpop.f32.mrf.mxu0
        %v2385 = vadd.f32 %v2192, %v2384
        %v2386 = vpop.f32.mrf.mxu0
        %v2387 = vadd.f32 %v2194, %v2386
        %2388 = vmatprep.mubr.bf16.mxu0 %v2020
        %2389 = vmatmul.mubr.bf16.gmra.mxu0 %v2019
        %v2390 = vpop.f32.mrf.mxu0
        %v2391 = vadd.f32 %v2198, %v2390
        %v2392 = vpop.f32.mrf.mxu0
        %v2393 = vadd.f32 %v2200, %v2392
        %v2394 = vpop.f32.mrf.mxu0
        %v2395 = vadd.f32 %v2202, %v2394
        %v2396 = vpop.f32.mrf.mxu0
        %v2397 = vadd.f32 %v2204, %v2396
        %2398 = vmatprep.mubr.bf16.mxu0 %v2024
        %2399 = vmatmul.mubr.bf16.gmra.mxu0 %v2023
        %v2400 = vpop.f32.mrf.mxu0
        %v2401 = vadd.f32 %v2208, %v2400
        %v2402 = vpop.f32.mrf.mxu0
        %v2403 = vadd.f32 %v2210, %v2402
        %v2404 = vpop.f32.mrf.mxu0
        %v2405 = vadd.f32 %v2212, %v2404
        %v2406 = vpop.f32.mrf.mxu0
        %v2407 = vadd.f32 %v2214, %v2406
        %2408 = vmatprep.mubr.bf16.mxu0 %v2028
        %2409 = vmatmul.mubr.bf16.gmra.mxu0 %v2027
        %v2410 = vpop.f32.mrf.mxu0
        %v2411 = vadd.f32 %v2218, %v2410
        %v2412 = vpop.f32.mrf.mxu0
        %v2413 = vadd.f32 %v2220, %v2412
        %v2414 = vpop.f32.mrf.mxu0
        %v2415 = vadd.f32 %v2222, %v2414
        %v2416 = vpop.f32.mrf.mxu0
        %v2417 = vadd.f32 %v2224, %v2416
        %2418 = vmatprep.mubr.bf16.mxu0 %v2032
        %2419 = vmatmul.mubr.bf16.gmra.mxu0 %v2031
        %v2420 = vpop.f32.mrf.mxu0
        %v2421 = vadd.f32 %v2228, %v2420
        %v2422 = vpop.f32.mrf.mxu0
        %v2423 = vadd.f32 %v2230, %v2422
        %v2424 = vpop.f32.mrf.mxu0
        %v2425 = vadd.f32 %v2232, %v2424
        %v2426 = vpop.f32.mrf.mxu0
        %v2427 = vadd.f32 %v2234, %v2426
        %2428 = vmatprep.mubr.bf16.mxu0 %v2036
        %2429 = vmatmul.mubr.bf16.gmra.mxu0 %v2035
        %v2430 = vpop.f32.mrf.mxu0
        %v2431 = vadd.f32 %v2238, %v2430
        %v2432 = vpop.f32.mrf.mxu0
        %v2433 = vadd.f32 %v2240, %v2432
        %v2434 = vpop.f32.mrf.mxu0
        %v2435 = vadd.f32 %v2242, %v2434
        %v2436 = vpop.f32.mrf.mxu0
        %v2437 = vadd.f32 %v2244, %v2436
        %2438 = vmatprep.mubr.bf16.mxu0 %v2040
        %2439 = vmatmul.mubr.bf16.gmra.mxu0 %v2039
        %v2440 = vpop.f32.mrf.mxu0
        %v2441 = vadd.f32 %v2248, %v2440
        %v2442 = vpop.f32.mrf.mxu0
        %v2443 = vadd.f32 %v2250, %v2442
        %v2444 = vpop.f32.mrf.mxu0
        %v2445 = vadd.f32 %v2252, %v2444
        %v2446 = vpop.f32.mrf.mxu0
        %v2447 = vadd.f32 %v2254, %v2446
        %2448 = vmatprep.mubr.bf16.mxu0 %v2044
        %2449 = vmatmul.mubr.bf16.gmra.mxu0 %v2043
        %v2450 = vpop.f32.mrf.mxu0
        %v2451 = vadd.f32 %v2258, %v2450
        %v2452 = vpop.f32.mrf.mxu0
        %v2453 = vadd.f32 %v2260, %v2452
        %v2454 = vpop.f32.mrf.mxu0
        %v2455 = vadd.f32 %v2262, %v2454
        %v2456 = vpop.f32.mrf.mxu0
        %v2457 = vadd.f32 %v2264, %v2456
        %2458 = vmatprep.mubr.bf16.mxu0 %v2048
        %2459 = vmatmul.mubr.bf16.gmra.mxu0 %v2047
        %v2460 = vpop.f32.mrf.mxu0
        %v2461 = vadd.f32 %v2268, %v2460
        %v2462 = vpop.f32.mrf.mxu0
        %v2463 = vadd.f32 %v2270, %v2462
        %v2464 = vpop.f32.mrf.mxu0
        %v2465 = vadd.f32 %v2272, %v2464
        %v2466 = vpop.f32.mrf.mxu0
        %v2467 = vadd.f32 %v2274, %v2466
        %2468 = vmatprep.mubr.bf16.mxu0 %v2052
        %2469 = vmatmul.mubr.bf16.gmra.mxu0 %v2051
        %v2470 = vpop.f32.mrf.mxu0
        %v2471 = vadd.f32 %v2278, %v2470
        %v2472 = vpop.f32.mrf.mxu0
        %v2473 = vadd.f32 %v2280, %v2472
        %v2474 = vpop.f32.mrf.mxu0
        %v2475 = vadd.f32 %v2282, %v2474
        %v2476 = vpop.f32.mrf.mxu0
        %v2477 = vadd.f32 %v2284, %v2476
        %2478 = vmatprep.mubr.bf16.mxu0 %v2056
        %2479 = vmatmul.mubr.bf16.gmra.mxu0 %v2055
        %v2480 = vpop.f32.mrf.mxu0
        %v2481 = vadd.f32 %v2288, %v2480
        %v2482 = vpop.f32.mrf.mxu0
        %v2483 = vadd.f32 %v2290, %v2482
        %v2484 = vpop.f32.mrf.mxu0
        %v2485 = vadd.f32 %v2292, %v2484
        %v2486 = vpop.f32.mrf.mxu0
        %v2487 = vadd.f32 %v2294, %v2486
        %2488 = vmatprep.mubr.bf16.mxu0 %v2060
        %2489 = vmatmul.mubr.bf16.gmra.mxu0 %v2059
        %v2490 = vpop.f32.mrf.mxu0
        %v2491 = vadd.f32 %v2298, %v2490
        %v2492 = vpop.f32.mrf.mxu0
        %v2493 = vadd.f32 %v2300, %v2492
        %v2494 = vpop.f32.mrf.mxu0
        %v2495 = vadd.f32 %v2302, %v2494
        %v2496 = vpop.f32.mrf.mxu0
        %v2497 = vadd.f32 %v2304, %v2496
        %2498 = vmatprep.mubr.bf16.mxu0 %v2064
        %2499 = vmatmul.mubr.bf16.gmra.mxu0 %v2063
        %v2500 = vpop.f32.mrf.mxu0
        %v2501 = vadd.f32 %v2308, %v2500
        %v2502 = vpop.f32.mrf.mxu0
        %v2503 = vadd.f32 %v2310, %v2502
        %v2504 = vpop.f32.mrf.mxu0
        %v2505 = vadd.f32 %v2312, %v2504
        %v2506 = vpop.f32.mrf.mxu0
        %v2507 = vadd.f32 %v2314, %v2506
        %2508 = vmatprep.mubr.bf16.mxu0 %v2068
        %2509 = vmatmul.mubr.bf16.gmra.mxu0 %v2067
        %v2510 = vpop.f32.mrf.mxu0
        %v2511 = vadd.f32 %v2318, %v2510
        %v2512 = vpop.f32.mrf.mxu0
        %v2513 = vadd.f32 %v2320, %v2512
        %v2514 = vpop.f32.mrf.mxu0
        %v2515 = vadd.f32 %v2322, %v2514
        %v2516 = vpop.f32.mrf.mxu0
        %v2517 = vadd.f32 %v2324, %v2516
        %2518 = vdwg.mxu0
        %v2519 = vmax.f32 %v2361, 0.0
        %v2520 = vmax.f32 %v2363, 0.0
        %v2521 = vmax.f32 %v2365, 0.0
        %v2522 = vmax.f32 %v2367, 0.0
        %v2523 = vmax.f32 %v2371, 0.0
        %v2524 = vmax.f32 %v2373, 0.0
        %v2525 = vmax.f32 %v2375, 0.0
        %v2526 = vmax.f32 %v2377, 0.0
        %v2527 = vmax.f32 %v2381, 0.0
        %v2528 = vmax.f32 %v2383, 0.0
        %v2529 = vmax.f32 %v2385, 0.0
        %v2530 = vmax.f32 %v2387, 0.0
        %v2531 = vmax.f32 %v2391, 0.0
        %v2532 = vmax.f32 %v2393, 0.0
        %v2533 = vmax.f32 %v2395, 0.0
        %v2534 = vmax.f32 %v2397, 0.0
        %v2535 = vmax.f32 %v2401, 0.0
        %v2536 = vmax.f32 %v2403, 0.0
        %v2537 = vmax.f32 %v2405, 0.0
        %v2538 = vmax.f32 %v2407, 0.0
        %v2539 = vmax.f32 %v2411, 0.0
        %v2540 = vmax.f32 %v2413, 0.0
        %v2541 = vmax.f32 %v2415, 0.0
        %v2542 = vmax.f32 %v2417, 0.0
        %v2543 = vmax.f32 %v2421, 0.0
        %v2544 = vmax.f32 %v2423, 0.0
        %v2545 = vmax.f32 %v2425, 0.0
        %v2546 = vmax.f32 %v2427, 0.0
        %v2547 = vmax.f32 %v2431, 0.0
        %v2548 = vmax.f32 %v2433, 0.0
        %v2549 = vmax.f32 %v2435, 0.0
        %v2550 = vmax.f32 %v2437, 0.0
        %v2551 = vmax.f32 %v2441, 0.0
        %v2552 = vmax.f32 %v2443, 0.0
        %v2553 = vmax.f32 %v2445, 0.0
        %v2554 = vmax.f32 %v2447, 0.0
        %v2555 = vmax.f32 %v2451, 0.0
        %v2556 = vmax.f32 %v2453, 0.0
        %v2557 = vmax.f32 %v2455, 0.0
        %v2558 = vmax.f32 %v2457, 0.0
        %v2559 = vmax.f32 %v2461, 0.0
        %v2560 = vmax.f32 %v2463, 0.0
        %v2561 = vmax.f32 %v2465, 0.0
        %v2562 = vmax.f32 %v2467, 0.0
        %v2563 = vmax.f32 %v2471, 0.0
        %v2564 = vmax.f32 %v2473, 0.0
        %v2565 = vmax.f32 %v2475, 0.0
        %v2566 = vmax.f32 %v2477, 0.0
        %v2567 = vmax.f32 %v2481, 0.0
        %v2568 = vmax.f32 %v2483, 0.0
        %v2569 = vmax.f32 %v2485, 0.0
        %v2570 = vmax.f32 %v2487, 0.0
        %v2571 = vmax.f32 %v2491, 0.0
        %v2572 = vmax.f32 %v2493, 0.0
        %v2573 = vmax.f32 %v2495, 0.0
        %v2574 = vmax.f32 %v2497, 0.0
        %v2575 = vmax.f32 %v2501, 0.0
        %v2576 = vmax.f32 %v2503, 0.0
        %v2577 = vmax.f32 %v2505, 0.0
        %v2578 = vmax.f32 %v2507, 0.0
        %v2579 = vmax.f32 %v2511, 0.0
        %v2580 = vmax.f32 %v2513, 0.0
        %v2581 = vmax.f32 %v2515, 0.0
        %v2582 = vmax.f32 %v2517, 0.0
        %v2583 = vld [vmem:[%s5] sm:$0xff]
        %v2584 = vpack.c.bf16 %v2521, %v2519
        %v2585 = vpack.c.bf16 %v2522, %v2520
        %v2586 = vpack.c.bf16 %v2525, %v2523
        %v2587 = vpack.c.bf16 %v2526, %v2524
        %v2588 = vpack.c.bf16 %v2529, %v2527
        %v2589 = vpack.c.bf16 %v2530, %v2528
        %v2590 = vpack.c.bf16 %v2533, %v2531
        %v2591 = vpack.c.bf16 %v2534, %v2532
        %v2592 = vpack.c.bf16 %v2537, %v2535
        %v2593 = vpack.c.bf16 %v2538, %v2536
        %v2594 = vpack.c.bf16 %v2541, %v2539
        %v2595 = vpack.c.bf16 %v2542, %v2540
        %v2596 = vpack.c.bf16 %v2545, %v2543
        %v2597 = vpack.c.bf16 %v2546, %v2544
        %v2598 = vpack.c.bf16 %v2549, %v2547
        %v2599 = vpack.c.bf16 %v2550, %v2548
        %v2600 = vpack.c.bf16 %v2553, %v2551
        %v2601 = vpack.c.bf16 %v2554, %v2552
        %v2602 = vpack.c.bf16 %v2557, %v2555
        %v2603 = vpack.c.bf16 %v2558, %v2556
        %v2604 = vpack.c.bf16 %v2561, %v2559
        %v2605 = vpack.c.bf16 %v2562, %v2560
        %v2606 = vpack.c.bf16 %v2565, %v2563
        %v2607 = vpack.c.bf16 %v2566, %v2564
        %v2608 = vpack.c.bf16 %v2569, %v2567
        %v2609 = vpack.c.bf16 %v2570, %v2568
        %v2610 = vpack.c.bf16 %v2573, %v2571
        %v2611 = vpack.c.bf16 %v2574, %v2572
        %v2612 = vpack.c.bf16 %v2577, %v2575
        %v2613 = vpack.c.bf16 %v2578, %v2576
        %v2614 = vpack.c.bf16 %v2581, %v2579
        %v2615 = vpack.c.bf16 %v2582, %v2580
        %v2616 = vld [vmem:[%s6] sm:$0xff]
        %2618 = vset.pattern.permute.xlu0 0
        %2619 = vperm.xlu0 %2618, %v2616
        %v2620 = vpop.permute.xlu0 %2619
        %v2623 = vunpack.c.l.b16 %v2583
        %v2624 = vunpack.c.h.b16 %v2583
        %v2625 = vpack.c.b16 %v2623, %v2623
        %v2626 = vpack.c.b16 %v2624, %v2624
        %2629 = vmatprep.subr.bf16.mxu0 %v2599
        %2630 = vmatpush1.bf16.msra.mxu0 %v2598
        %2631 = vmatprep.subr.bf16.mxu0 %v2597
        %2632 = vmatpush1.bf16.msra.mxu0 %v2596
        %2633 = vmatprep.subr.bf16.mxu0 %v2595
        %2634 = vmatpush1.bf16.msra.mxu0 %v2594
        %2635 = vmatprep.subr.bf16.mxu0 %v2593
        %2636 = vmatpush1.bf16.msra.mxu0 %v2592
        %2637 = vmatprep.subr.bf16.mxu0 %v2591
        %2638 = vmatpush1.bf16.msra.mxu0 %v2590
        %2639 = vmatprep.subr.bf16.mxu0 %v2589
        %2640 = vmatpush1.bf16.msra.mxu0 %v2588
        %2641 = vmatprep.subr.bf16.mxu0 %v2587
        %2642 = vmatpush1.bf16.msra.mxu0 %v2586
        %2643 = vmatprep.subr.bf16.mxu0 %v2585
        %2644 = vmatpush1.bf16.msra.mxu0 %v2584
        %2645 = vmatprep.subr.bf16.mxu0 %v2615
        %2646 = vmatpush2.bf16.msra.mxu0 %v2614
        %2647 = vmatprep.subr.bf16.mxu0 %v2613
        %2648 = vmatpush2.bf16.msra.mxu0 %v2612
        %2649 = vmatprep.subr.bf16.mxu0 %v2611
        %2650 = vmatpush2.bf16.msra.mxu0 %v2610
        %2651 = vmatprep.subr.bf16.mxu0 %v2609
        %2652 = vmatpush2.bf16.msra.mxu0 %v2608
        %2653 = vmatprep.subr.bf16.mxu0 %v2607
        %2654 = vmatpush2.bf16.msra.mxu0 %v2606
        %2655 = vmatprep.subr.bf16.mxu0 %v2605
        %2656 = vmatpush2.bf16.msra.mxu0 %v2604
        %2657 = vmatprep.subr.bf16.mxu0 %v2603
        %2658 = vmatpush2.bf16.msra.mxu0 %v2602
        %2659 = vmatprep.subr.bf16.mxu0 %v2601
        %2660 = vmatpush2.bf16.msra.mxu0 %v2600
        %2661 = vmatprep.mubr.bf16.mxu0 %v2626
        %2662 = vmatmul.mubr.bf16.gmra.mxu0 %v2625
        %v2663 = vpop.f32.mrf.mxu0
        %v2664 = vadd.f32 %v2620, %v2663
        %v2665 = vpop.f32.mrf.mxu0
        %v2666 = vadd.f32 %v2620, %v2665
        %v2667 = vpop.f32.mrf.mxu0
        %v2668 = vpop.f32.mrf.mxu0
        %2669 = vdwg.mxu0
        %2670 = vst [vmem:[%s311] sm:$0xff] %v2664
        %2671 = vst [vmem:[%s311 + $0x8] sm:$0xff] %v2666
        %s2672 = sand.u32 %s198, 1
        %s2673 = scalar_lea.sflag [#allocation4], %s2672
        %s2674 = sand.u32 %s198, 1
        %s2675 = smul.addr %s2674, 16
        %s2676 = scalar_lea.vmem [#allocation5], %s2675
        // Predicated region
        $region53: #{tpu_custom_call.1} parent=47 // pred_check
          %p2677 = pneg %p208
        $region54: #{tpu_custom_call.1} parent=47 // pred_check_branch
          %2679 = sbr.rel (%p2677) target = $region56
        $region55: #{tpu_custom_call.1} parent=47 // pred_region
          %s2680 = smul.u32 2, %s27
          %s2682 = ssub.s32 256, 256
          %2683 = vsyncadd %s2673, %s2682
          %s2684 = smul.addr %s26, 2
          %s2685 = sadd.s32 %s2680, %s2684
          %s2686 = smul.addr %s2685, 128
          %s2687 = scalar_lea.hbm %s7, %s2686
          %s2689 = sshll.u32 %s2676, 4
          %s2690 = int_to_ptr.vmem [resolvable:$true] %s2689
          %2692 = dma.vmem_to_hbm [thread:$0]  %s2690, 256, %s2687, %s2673
        $region56: #{tpu_custom_call.1} parent=47 // pred_fallthru
          _
      $region48: #{tpu_custom_call.1} parent=5 // pred_fallthru
        _
      %p2693 = scmp.le.s32.totalorder 2, %s17
      // Predicated region
      $region57: #{tpu_custom_call.1} parent=5 // pred_check
        %p2694 = pneg %p2693
      $region58: #{tpu_custom_call.1} parent=5 // pred_check_branch
        %2696 = sbr.rel (%p2694) target = $region60
      $region59: #{tpu_custom_call.1} parent=5 // pred_region
        %s2697 = ssub.s32 %s17, 2
        // Predicated region
        $region61: #{tpu_custom_call.1} parent=59 // pred_check
          %p2698 = pneg %p214
        $region62: #{tpu_custom_call.1} parent=59 // pred_check_branch
          %2700 = sbr.rel (%p2698) target = $region64
        $region63: #{tpu_custom_call.1} parent=59 // pred_region
          %s2701 = sand.u32 %s199, 1
          %s2702 = scalar_lea.sflag [#allocation4], %s2701
          %s2703 = sand.u32 %s199, 1
          %s2704 = smul.addr %s2703, 16
          %s2705 = scalar_lea.vmem [#allocation5], %s2704
          %2706 = dma.done %s2702, 256
        $region64: #{tpu_custom_call.1} parent=59 // pred_fallthru
          _
      $region60: #{tpu_custom_call.1} parent=5 // pred_fallthru
        _
    $region6: #{tpu_custom_call.1} parent=1 // loop_footer
      %s21 = sadd.s32 1, %s17
    $region7: #{tpu_custom_call.1} parent=1 // loop_footer_branch
      %16 = sbr.rel target = $region3
    $region8: #{tpu_custom_call.1} parent=1 // loop_exit
      _
    %2707 = vsyncpa [#allocation3], 1
    %s2708 = scalar_lea.sflag [#allocation3], 1
    %2709 = vsyncpa %s2708, 1
    %2710 = vsyncpa [#allocation4], 1
    %s2711 = scalar_lea.sflag [#allocation4], 1
    %2712 = vsyncpa %s2711, 1

</llo_original>
